<compile_context>
chip_gen: v7x
topology: tpu7x:2x2x1
jax: 0.10.0
libtpu: 0.0.40
codegen_flags: <defaults>
</compile_context>

<pallas_src>
import functools
import math

import jax
import jax.numpy as jnp
import numpy as np
from jax import lax
from jax.experimental import pallas as pl
from jax.experimental.pallas import tpu as pltpu


# ----------------------------------------------------------------------------
# wrapper-side precompute (grid-invariant; done once per forward per layer)
# ----------------------------------------------------------------------------
def precompute_layer(p):
    sp = jax.nn.softplus
    G, Out, In = p["rw_mu"].shape
    return dict(
        gw_mu=p["gw_mu"],                                   # (Out, In)
        gw_sigma=sp(p["gw_rho"]),                           # (Out, In)
        gb_mu=p["gb_mu"].reshape(1, Out),
        gb_sigma=sp(p["gb_rho"]).reshape(1, Out),
        rw_mu=p["rw_mu"],                                   # (G, Out, In)
        rw_sigma=sp(p["rw_rho"]),                           # (G, Out, In)
        rb_mu=p["rb_mu"].reshape(G, 1, Out),
        rb_sigma=sp(p["rb_rho"]).reshape(G, 1, Out),
        sp_alpha=sp(p["alpha"]).reshape(1, In),
        sp_beta=sp(p["beta"]).reshape(1, In),
        ard=(sp(p["alpha"]) * sp(p["beta"])).reshape(1, In),
    )


# ----------------------------------------------------------------------------
# group schedule: sort batch by group, pad each group to a multiple of TB
# so every TB-sample block belongs to exactly one group.
# ----------------------------------------------------------------------------
def build_group_schedule(group_ids, num_groups, tb=8):
    assert tb % 8 == 0, "TB must be a multiple of 8 (sublane constraint)"
    B = group_ids.shape[0]
    gids = group_ids.astype(jnp.int32)
    order = jnp.argsort(gids)                                      # (B,)
    sorted_g = gids[order]
    counts = jnp.bincount(gids, length=num_groups).astype(jnp.int32)
    padded = ((counts + tb - 1) // tb) * tb
    start_sorted = jnp.concatenate([jnp.zeros((1,), jnp.int32),
                                    jnp.cumsum(counts)[:-1]])
    start_padded = jnp.concatenate([jnp.zeros((1,), jnp.int32),
                                    jnp.cumsum(padded)[:-1]])
    rank = jnp.arange(B, dtype=jnp.int32) - start_sorted[sorted_g]
    slot_sorted = start_padded[sorted_g] + rank                    # padded slot of sorted k
    slot_of_orig = jnp.zeros((B,), jnp.int32).at[order].set(slot_sorted)

    # static upper bound on the padded batch size (multiple of tb)
    b_pad = tb * ((B + num_groups * (tb - 1) + tb - 1) // tb)
    num_blocks = b_pad // tb
    cum_padded = jnp.cumsum(padded)
    blk_start = jnp.arange(num_blocks, dtype=jnp.int32) * tb
    block_group = jnp.sum((blk_start[:, None] >= cum_padded[None, :]).astype(jnp.int32),
                          axis=1)
    block_group = jnp.minimum(block_group, num_groups - 1).astype(jnp.int32)
    return dict(slot_of_orig=slot_of_orig, block_group=block_group,
                b_pad=b_pad, num_blocks=num_blocks, tb=tb)


# ----------------------------------------------------------------------------
# forward kernels
# ----------------------------------------------------------------------------
def _fwd_compute(x_ref, gwmu_ref, gwsig_ref, gbmu_ref, gbsig_ref,
                 rwmu_ref, rwsig_ref, rbmu_ref, rbsig_ref, ard_ref,
                 eps_w, eps_b, out_ref, apply_relu):
    gw_mu, gw_sig = gwmu_ref[...], gwsig_ref[...]          # (TOUT, In)
    rw_mu, rw_sig = rwmu_ref[0], rwsig_ref[0]              # (TOUT, In)

    # per-block (per-group) invariant terms
    w_mean = gw_mu + gw_sig * rw_mu                        # (TOUT, In) -> MXU operand
    coef = gw_sig * rw_sig                                 # (TOUT, In)

    xv = x_ref[...] * ard_ref[...]                         # (TB, In)

    # mean path: true (TB, In) x (In, TOUT) matmul on the MXU
    y = lax.dot_general(xv, w_mean, (((1,), (1,)), ((), ())),
                        preferred_element_type=jnp.float32)            # (TB, TOUT)
    # per-sample noise path: sum_i xv[b,i] * coef[o,i] * eps_w[b,o,i]
    y = y + jnp.sum(xv[:, None, :] * (coef[None, :, :] * eps_w), axis=-1)

    bias = gbmu_ref[...] + gbsig_ref[...] * (rbmu_ref[0] + rbsig_ref[0] * eps_b)
    y = y + bias
    if apply_relu:
        y = jnp.maximum(y, 0.0)
    out_ref[...] = y


def _fwd_kernel_eps(apply_relu, bg_ref, x_ref, gwmu_ref, gwsig_ref, gbmu_ref, gbsig_ref,
                    rwmu_ref, rwsig_ref, rbmu_ref, rbsig_ref, ard_ref,
                    epsw_ref, epsb_ref, out_ref):
    del bg_ref  # only used by the index maps
    _fwd_compute(x_ref, gwmu_ref, gwsig_ref, gbmu_ref, gbsig_ref,
                 rwmu_ref, rwsig_ref, rbmu_ref, rbsig_ref, ard_ref,
                 epsw_ref[...], epsb_ref[...], out_ref, apply_relu)


def _fwd_kernel_rng(apply_relu, bg_ref, seed_ref, x_ref, gwmu_ref, gwsig_ref, gbmu_ref,
                    gbsig_ref, rwmu_ref, rwsig_ref, rbmu_ref, rbsig_ref, ard_ref, out_ref):
    del bg_ref
    ot, blk = pl.program_id(0), pl.program_id(1)
    pltpu.prng_seed(seed_ref[0] + blk * pl.num_programs(0) + ot)
    tb, tout = out_ref.shape
    in_f = x_ref.shape[1]
    eps_w = pltpu.stateful_normal((tb, tout, in_f), jnp.float32)
    eps_b = pltpu.stateful_normal((tb, tout), jnp.float32)
    _fwd_compute(x_ref, gwmu_ref, gwsig_ref, gbmu_ref, gbsig_ref,
                 rwmu_ref, rwsig_ref, rbmu_ref, rbsig_ref, ard_ref,
                 eps_w, eps_b, out_ref, apply_relu)


def layer_forward(x, sched, q, eps_w, eps_b, apply_relu, rng_seed=None, out_tile=None):
    B, In = x.shape
    Out = q["gw_mu"].shape[0]
    tb, b_pad, nblk = sched["tb"], sched["b_pad"], sched["num_blocks"]

    tout = Out if out_tile is None else out_tile
    assert Out % tout == 0 and (tout == Out or tout % 128 == 0), \
        "out_tile must divide Out and be a multiple of 128 (lane constraint)"
    n_out_tiles = Out // tout

    slot = sched["slot_of_orig"]
    x_pad = jnp.zeros((b_pad, In), jnp.float32).at[slot].set(x.astype(jnp.float32))

    common_specs = [
        pl.BlockSpec((tb, In), lambda ot, blk, *_: (blk, 0)),                   # x
        pl.BlockSpec((tout, In), lambda ot, blk, *_: (ot, 0)),                  # gw_mu
        pl.BlockSpec((tout, In), lambda ot, blk, *_: (ot, 0)),                  # gw_sigma
        pl.BlockSpec((1, tout), lambda ot, blk, *_: (0, ot)),                   # gb_mu
        pl.BlockSpec((1, tout), lambda ot, blk, *_: (0, ot)),                   # gb_sigma
        pl.BlockSpec((1, tout, In), lambda ot, blk, bg, *_: (bg[blk], ot, 0)),  # rw_mu
        pl.BlockSpec((1, tout, In), lambda ot, blk, bg, *_: (bg[blk], ot, 0)),  # rw_sigma
        pl.BlockSpec((1, 1, tout), lambda ot, blk, bg, *_: (bg[blk], 0, ot)),   # rb_mu
        pl.BlockSpec((1, 1, tout), lambda ot, blk, bg, *_: (bg[blk], 0, ot)),   # rb_sigma
        pl.BlockSpec((1, In), lambda ot, blk, *_: (0, 0)),                      # ard
    ]
    out_spec = pl.BlockSpec((tb, tout), lambda ot, blk, *_: (blk, ot))
    common_args = (x_pad, q["gw_mu"], q["gw_sigma"], q["gb_mu"], q["gb_sigma"],
                   q["rw_mu"], q["rw_sigma"], q["rb_mu"], q["rb_sigma"], q["ard"])
    cparams = pltpu.CompilerParams(dimension_semantics=("parallel", "parallel"))

    if rng_seed is None:
        eps_w_pad = jnp.zeros((b_pad, Out, In), jnp.float32).at[slot].set(eps_w)
        eps_b_pad = jnp.zeros((b_pad, Out), jnp.float32).at[slot].set(eps_b)
        eps_specs = [
            pl.BlockSpec((tb, tout, In), lambda ot, blk, *_: (blk, ot, 0)),
            pl.BlockSpec((tb, tout), lambda ot, blk, *_: (blk, ot)),
        ]
        out_pad = pl.pallas_call(
            functools.partial(_fwd_kernel_eps, apply_relu),
            out_shape=jax.ShapeDtypeStruct((b_pad, Out), jnp.float32),
            grid_spec=pltpu.PrefetchScalarGridSpec(
                num_scalar_prefetch=1,
                grid=(n_out_tiles, nblk),
                in_specs=common_specs + eps_specs,
                out_specs=out_spec,
            ),
            compiler_params=cparams,
        )(sched["block_group"], *common_args, eps_w_pad, eps_b_pad)
    else:
        seed = jnp.asarray([rng_seed], jnp.int32)
        out_pad = pl.pallas_call(
            functools.partial(_fwd_kernel_rng, apply_relu),
            out_shape=jax.ShapeDtypeStruct((b_pad, Out), jnp.float32),
            grid_spec=pltpu.PrefetchScalarGridSpec(
                num_scalar_prefetch=2,
                grid=(n_out_tiles, nblk),
                in_specs=common_specs,
                out_specs=out_spec,
            ),
            compiler_params=cparams,
        )(sched["block_group"], seed, *common_args)

    return out_pad[slot]


# ----------------------------------------------------------------------------
# KL kernel: blocked over groups, SMEM scalar accumulator
# ----------------------------------------------------------------------------
def _kl_kernel(gwmu_ref, gwsig_ref, gbsig_ref, spa_ref, spb_ref,
               rwmu_ref, rwsig_ref, out_ref, acc_ref):
    g = pl.program_id(0)
    log_2pi = jnp.float32(math.log(2.0 * math.pi))

    @pl.when(g == 0)
    def _():
        gw_mu, gw_sig, gb_sig = gwmu_ref[...], gwsig_ref[...], gbsig_ref[...]
        group_kl = jnp.sum(-jnp.log(gw_sig) + 0.5 * (gw_sig * gw_sig + gw_mu * gw_mu) - 0.5)

        def half_normal(s):
            ls = jnp.log(s)
            return jnp.sum(-0.5 * log_2pi - ls + 0.5 * (ls * ls + s * s) - 0.5)

        ard_kl = jnp.sum(spa_ref[...]) + jnp.sum(spb_ref[...])
        acc_ref[0] = group_kl + half_normal(gw_sig) + half_normal(gb_sig) + ard_kl

    rw_mu, rw_sig = rwmu_ref[0], rwsig_ref[0]
    acc_ref[0] += jnp.sum(-0.5 * log_2pi - jnp.log(rw_sig)
                          + 0.5 * (rw_sig * rw_sig + rw_mu * rw_mu) - 0.5)

    @pl.when(g == pl.num_programs(0) - 1)
    def _():
        out_ref[0, 0] = acc_ref[0]


def layer_kl(q):
    Out, In = q["gw_mu"].shape
    G = q["rw_mu"].shape[0]
    kl = pl.pallas_call(
        _kl_kernel,
        out_shape=jax.ShapeDtypeStruct((1, 1), jnp.float32),
        grid_spec=pltpu.PrefetchScalarGridSpec(
            num_scalar_prefetch=0,
            grid=(G,),
            in_specs=[
                pl.BlockSpec((Out, In), lambda g: (0, 0)),
                pl.BlockSpec((Out, In), lambda g: (0, 0)),
                pl.BlockSpec((1, Out), lambda g: (0, 0)),
                pl.BlockSpec((1, In), lambda g: (0, 0)),
                pl.BlockSpec((1, In), lambda g: (0, 0)),
                pl.BlockSpec((1, Out, In), lambda g: (g, 0, 0)),
                pl.BlockSpec((1, Out, In), lambda g: (g, 0, 0)),
            ],
            out_specs=pl.BlockSpec(memory_space=pltpu.MemorySpace.SMEM),
            scratch_shapes=[pltpu.SMEM((1,), jnp.float32)],
        ),
        compiler_params=pltpu.CompilerParams(dimension_semantics=("arbitrary",)),
    )(q["gw_mu"], q["gw_sigma"], q["gb_sigma"], q["sp_alpha"], q["sp_beta"],
      q["rw_mu"], q["rw_sigma"])
    return kl[0, 0]


# ----------------------------------------------------------------------------
# model wrapper
# ----------------------------------------------------------------------------
def hbnn_forward(x, group_ids, layer_params, eps_list, rng_seed=None, tb=8):
    n = len(layer_params)
    G = layer_params[0]["rw_mu"].shape[0]
    sched = build_group_schedule(group_ids, G, tb=tb)
    h = x
    kl_sum = jnp.float32(0.0)
    for idx, p in enumerate(layer_params):
        q = precompute_layer(p)
        if eps_list is not None:
            eps_w, eps_b = eps_list[idx]
        else:
            eps_w = eps_b = None
        seed = None if rng_seed is None else int(rng_seed) + 7919 * idx
        h = layer_forward(h, sched, q, eps_w, eps_b,
                          apply_relu=idx < n - 1, rng_seed=seed)
        kl_sum = kl_sum + layer_kl(q)
    return h, kl_sum


# ----------------------------------------------------------------------------
# parameter init (deterministic, mirrors reset_parameters shapes)
# ----------------------------------------------------------------------------
def init_layer_params(key, in_f, out_f, num_groups):
    k0, k1, k2, k3 = jax.random.split(key, 4)
    bound_g = 1.0 / np.sqrt(in_f)
    bound_r = 1.0 / np.sqrt(out_f * in_f)
    return dict(
        gw_mu=jax.random.uniform(k0, (out_f, in_f), jnp.float32, -bound_g, bound_g),
        gw_rho=jnp.full((out_f, in_f), -5.0, jnp.float32),
        gb_mu=jax.random.uniform(k1, (out_f,), jnp.float32, -0.1, 0.1),
        gb_rho=jnp.full((out_f,), -5.0, jnp.float32),
        rw_mu=jax.random.uniform(k2, (num_groups, out_f, in_f), jnp.float32,
                                 -bound_r, bound_r),
        rw_rho=jnp.full((num_groups, out_f, in_f), -5.0, jnp.float32),
        rb_mu=jax.random.uniform(k3, (num_groups, out_f), jnp.float32, -0.1, 0.1),
        rb_rho=jnp.full((num_groups, out_f), -5.0, jnp.float32),
        alpha=jnp.ones((in_f,), jnp.float32),
        beta=jnp.ones((in_f,), jnp.float32),
    )


# ----------------------------------------------------------------------------
# pure-JAX reference
# ----------------------------------------------------------------------------
def _ref_layer(x, gids, p, eps_w, eps_b, apply_relu):
    sp = jax.nn.softplus
    gw_s, gb_s = sp(p["gw_rho"]), sp(p["gb_rho"])
    rw_s, rb_s = sp(p["rw_rho"]), sp(p["rb_rho"])
    raw_w = p["rw_mu"][gids] + rw_s[gids] * eps_w
    raw_b = p["rb_mu"][gids] + rb_s[gids] * eps_b
    w = p["gw_mu"][None] + gw_s[None] * raw_w
    b = p["gb_mu"][None] + gb_s[None] * raw_b
    xv = x * (sp(p["alpha"]) * sp(p["beta"]))[None]
    y = jnp.einsum("bi,boi->bo", xv, w) + b
    return jnp.maximum(y, 0.0) if apply_relu else y


def _ref_kl(p):
    sp = jax.nn.softplus
    gw_s, gb_s, rw_s = sp(p["gw_rho"]), sp(p["gb_rho"]), sp(p["rw_rho"])
    log_2pi = math.log(2.0 * math.pi)
    group_kl = jnp.sum(-jnp.log(gw_s) + 0.5 * (gw_s**2 + p["gw_mu"]**2) - 0.5)
    ind_kl = jnp.sum(-0.5 * log_2pi - jnp.log(rw_s)
                     + 0.5 * (rw_s**2 + p["rw_mu"]**2) - 0.5)
    hn = lambda s: jnp.sum(-0.5 * log_2pi - jnp.log(s)
                           + 0.5 * (jnp.log(s)**2 + s**2) - 0.5)
    ard = jnp.sum(sp(p["alpha"])) + jnp.sum(sp(p["beta"]))
    return group_kl + ind_kl + hn(gw_s) + hn(gb_s) + ard


# ----------------------------------------------------------------------------
if __name__ == "__main__":
    B = 4
    input_dim, hidden_dims, output_dim = 16, [32, 32], 8
    num_groups = 3
    dims = [input_dim] + hidden_dims + [output_dim]

    key = jax.random.PRNGKey(0)
    k_x, k_g, k_p, k_e = jax.random.split(key, 4)

    x = jax.random.normal(k_x, (B, input_dim), jnp.float32)
    group_ids = jnp.array([0, 1, 2, 1], dtype=jnp.int32)

    layer_params, eps_list = [], []
    pkeys = jax.random.split(k_p, len(dims) - 1)
    ekeys = jax.random.split(k_e, len(dims) - 1)
    for li in range(len(dims) - 1):
        in_f, out_f = dims[li], dims[li + 1]
        layer_params.append(init_layer_params(pkeys[li], in_f, out_f, num_groups))
        ew_key, eb_key = jax.random.split(ekeys[li])
        eps_list.append((
            jax.random.normal(ew_key, (B, out_f, in_f), jnp.float32),
            jax.random.normal(eb_key, (B, out_f), jnp.float32),
        ))

    # --- verified path: externally supplied eps (exactly matches the reference)
    out, kl = hbnn_forward(x, group_ids, layer_params, eps_list)
    jax.block_until_ready((out, kl))

    h_ref = x
    kl_ref = jnp.float32(0.0)
    for idx, (p, (ew, eb)) in enumerate(zip(layer_params, eps_list)):
        h_ref = _ref_layer(h_ref, group_ids, p, ew, eb, idx < len(layer_params) - 1)
        kl_ref = kl_ref + _ref_kl(p)
    assert np.allclose(np.asarray(out), np.asarray(h_ref), rtol=1e-4, atol=1e-4)
    assert np.allclose(float(kl), float(kl_ref), rtol=1e-4, atol=1e-3)

    # --- optional fast path: eps generated in-kernel (removes the eps_w HBM stream)
    if hasattr(pltpu, "stateful_normal"):
        rng_out = None
        try:
            rng_out, _ = hbnn_forward(x, group_ids, layer_params, None, rng_seed=1234)
            rng_out = jax.block_until_ready(rng_out)
        except Exception:
            # TODO(synk): in-kernel RNG path unavailable on this runtime; the
            # external-eps path above remains the verified implementation.
            rng_out = None
        if rng_out is not None:
            # sigmas are tiny (softplus(-5) ~ 0.0067), so any valid noise stream
            # must give outputs close to the zero-noise forward.
            zero_eps = [(jnp.zeros_like(ew), jnp.zeros_like(eb)) for ew, eb in eps_list]
            h_mean = x
            for idx, (p, (ew, eb)) in enumerate(zip(layer_params, zero_eps)):
                h_mean = _ref_layer(h_mean, group_ids, p, ew, eb,
                                    idx < len(layer_params) - 1)
            assert rng_out.shape == h_mean.shape
            assert np.all(np.isfinite(np.asarray(rng_out)))
            assert np.allclose(np.asarray(rng_out), np.asarray(h_mean), atol=0.25)

    print("KERNEL_OK")
</pallas_src>

<mosaic_0001>
module attributes {stable_mosaic.version = 11 : i64} {
  func.func @_fwd_kernel_eps(%arg0: i32, %arg1: i32, %arg2: memref<4xi32, #tpu.memory_space<smem>>, %arg3: memref<8x16xf32, #tpu.memory_space<vmem>>, %arg4: memref<32x16xf32, #tpu.memory_space<vmem>>, %arg5: memref<32x16xf32, #tpu.memory_space<vmem>>, %arg6: memref<1x32xf32, #tpu.memory_space<vmem>>, %arg7: memref<1x32xf32, #tpu.memory_space<vmem>>, %arg8: memref<1x32x16xf32, #tpu.memory_space<vmem>>, %arg9: memref<1x32x16xf32, #tpu.memory_space<vmem>>, %arg10: memref<1x1x32xf32, #tpu.memory_space<vmem>>, %arg11: memref<1x1x32xf32, #tpu.memory_space<vmem>>, %arg12: memref<1x16xf32, #tpu.memory_space<vmem>>, %arg13: memref<8x32x16xf32, #tpu.memory_space<vmem>>, %arg14: memref<8x32xf32, #tpu.memory_space<vmem>>, %arg15: memref<8x32xf32, #tpu.memory_space<vmem>>) attributes {dimension_semantics = [#tpu.dimension_semantics<parallel>, #tpu.dimension_semantics<parallel>], iteration_bounds = array<i64: 1, 4>, scalar_prefetch = 1 : i64, scratch_operands = 0 : i64, tpu.core_type = #tpu.core_type<tc>, window_params = [{transform_indices = @transform_0, window_bounds = array<i64: 8, 16>}, {transform_indices = @transform_1, window_bounds = array<i64: 32, 16>}, {transform_indices = @transform_2, window_bounds = array<i64: 32, 16>}, {transform_indices = @transform_3, window_bounds = array<i64: 1, 32>}, {transform_indices = @transform_4, window_bounds = array<i64: 1, 32>}, {transform_indices = @transform_5, window_bounds = array<i64: 1, 32, 16>}, {transform_indices = @transform_6, window_bounds = array<i64: 1, 32, 16>}, {transform_indices = @transform_7, window_bounds = array<i64: 1, 1, 32>}, {transform_indices = @transform_8, window_bounds = array<i64: 1, 1, 32>}, {pipeline_mode = #tpu.pipeline_mode<synchronous>, transform_indices = @transform_9, window_bounds = array<i64: 1, 16>}, {transform_indices = @transform_10, window_bounds = array<i64: 8, 32, 16>}, {transform_indices = @transform_11, window_bounds = array<i64: 8, 32>}, {transform_indices = @transform_12, window_bounds = array<i64: 8, 32>}]} {
    %c0 = arith.constant 0 : index
    %c0_0 = arith.constant 0 : index
    %c0_1 = arith.constant 0 : index
    %0 = vector.load %arg13[%c0, %c0_0, %c0_1] : memref<8x32x16xf32, #tpu.memory_space<vmem>>, vector<8x32x16xf32>
    %c0_2 = arith.constant 0 : index
    %c0_3 = arith.constant 0 : index
    %1 = vector.load %arg14[%c0_2, %c0_3] : memref<8x32xf32, #tpu.memory_space<vmem>>, vector<8x32xf32>
    %c0_4 = arith.constant 0 : index
    %c0_5 = arith.constant 0 : index
    %2 = vector.load %arg4[%c0_4, %c0_5] : memref<32x16xf32, #tpu.memory_space<vmem>>, vector<32x16xf32>
    %c0_6 = arith.constant 0 : index
    %c0_7 = arith.constant 0 : index
    %3 = vector.load %arg5[%c0_6, %c0_7] : memref<32x16xf32, #tpu.memory_space<vmem>>, vector<32x16xf32>
    %c0_8 = arith.constant 0 : index
    %c0_9 = arith.constant 0 : index
    %c0_10 = arith.constant 0 : index
    %4 = vector.load %arg8[%c0_8, %c0_9, %c0_10] : memref<1x32x16xf32, #tpu.memory_space<vmem>>, vector<1x32x16xf32>
    %5 = vector.shape_cast %4 : vector<1x32x16xf32> to vector<32x16xf32>
    %c0_11 = arith.constant 0 : index
    %c0_12 = arith.constant 0 : index
    %c0_13 = arith.constant 0 : index
    %6 = vector.load %arg9[%c0_11, %c0_12, %c0_13] : memref<1x32x16xf32, #tpu.memory_space<vmem>>, vector<1x32x16xf32>
    %7 = vector.shape_cast %6 : vector<1x32x16xf32> to vector<32x16xf32>
    %8 = arith.mulf %3, %5 : vector<32x16xf32>
    %9 = arith.addf %2, %8 : vector<32x16xf32>
    %10 = arith.mulf %3, %7 : vector<32x16xf32>
    %c0_14 = arith.constant 0 : index
    %c0_15 = arith.constant 0 : index
    %11 = vector.load %arg3[%c0_14, %c0_15] : memref<8x16xf32, #tpu.memory_space<vmem>>, vector<8x16xf32>
    %c0_16 = arith.constant 0 : index
    %c0_17 = arith.constant 0 : index
    %12 = vector.load %arg12[%c0_16, %c0_17] : memref<1x16xf32, #tpu.memory_space<vmem>>, vector<1x16xf32>
    %13 = vector.broadcast %12 : vector<1x16xf32> to vector<8x16xf32>
    %14 = arith.mulf %11, %13 : vector<8x16xf32>
    %cst = arith.constant dense<0.000000e+00> : vector<8x32xf32>
    %15 = tpu.matmul %14, %9, %cst {dimension_numbers = #tpu.dot_dimension_numbers<[1], [1], [0], [0], [0, 0, 1, 0], [], []>} : vector<8x16xf32>, vector<32x16xf32>, vector<8x32xf32> -> vector<8x32xf32>
    %16 = vector.shape_cast %14 : vector<8x16xf32> to vector<8x1x16xf32>
    %17 = vector.shape_cast %10 : vector<32x16xf32> to vector<1x32x16xf32>
    %18 = vector.broadcast %17 : vector<1x32x16xf32> to vector<8x32x16xf32>
    %19 = arith.mulf %18, %0 : vector<8x32x16xf32>
    %20 = vector.broadcast %16 : vector<8x1x16xf32> to vector<8x32x16xf32>
    %21 = arith.mulf %20, %19 : vector<8x32x16xf32>
    %cst_18 = arith.constant dense<0.000000e+00> : vector<8x32xf32>
    %22 = vector.multi_reduction <add>, %21, %cst_18 [2] : vector<8x32x16xf32> to vector<8x32xf32>
    %23 = arith.addf %15, %22 : vector<8x32xf32>
    %c0_19 = arith.constant 0 : index
    %c0_20 = arith.constant 0 : index
    %24 = vector.load %arg6[%c0_19, %c0_20] : memref<1x32xf32, #tpu.memory_space<vmem>>, vector<1x32xf32>
    %c0_21 = arith.constant 0 : index
    %c0_22 = arith.constant 0 : index
    %25 = vector.load %arg7[%c0_21, %c0_22] : memref<1x32xf32, #tpu.memory_space<vmem>>, vector<1x32xf32>
    %c0_23 = arith.constant 0 : index
    %c0_24 = arith.constant 0 : index
    %c0_25 = arith.constant 0 : index
    %26 = vector.load %arg10[%c0_23, %c0_24, %c0_25] : memref<1x1x32xf32, #tpu.memory_space<vmem>>, vector<1x1x32xf32>
    %27 = vector.shape_cast %26 : vector<1x1x32xf32> to vector<1x32xf32>
    %c0_26 = arith.constant 0 : index
    %c0_27 = arith.constant 0 : index
    %c0_28 = arith.constant 0 : index
    %28 = vector.load %arg11[%c0_26, %c0_27, %c0_28] : memref<1x1x32xf32, #tpu.memory_space<vmem>>, vector<1x1x32xf32>
    %29 = vector.shape_cast %28 : vector<1x1x32xf32> to vector<1x32xf32>
    %30 = vector.broadcast %29 : vector<1x32xf32> to vector<8x32xf32>
    %31 = arith.mulf %30, %1 : vector<8x32xf32>
    %32 = vector.broadcast %27 : vector<1x32xf32> to vector<8x32xf32>
    %33 = arith.addf %32, %31 : vector<8x32xf32>
    %34 = vector.broadcast %25 : vector<1x32xf32> to vector<8x32xf32>
    %35 = arith.mulf %34, %33 : vector<8x32xf32>
    %36 = vector.broadcast %24 : vector<1x32xf32> to vector<8x32xf32>
    %37 = arith.addf %36, %35 : vector<8x32xf32>
    %38 = arith.addf %23, %37 : vector<8x32xf32>
    %cst_29 = arith.constant 0.000000e+00 : f32
    %39 = vector.broadcast %cst_29 : f32 to vector<8x32xf32>
    %40 = arith.maximumf %38, %39 : vector<8x32xf32>
    %c0_30 = arith.constant 0 : index
    %c0_31 = arith.constant 0 : index
    %41 = vector.load %arg15[%c0_30, %c0_31] : memref<8x32xf32, #tpu.memory_space<vmem>>, vector<8x32xf32>
    tpu.vector_store %arg15[%c0_30, %c0_31], %40 {strides = array<i32>} : memref<8x32xf32, #tpu.memory_space<vmem>>, vector<8x32xf32>,
    return
  }
  func.func @transform_0(%arg0: i32, %arg1: i32, %arg2: memref<4xi32, #tpu.memory_space<smem>>) -> (i32, i32) {
    %c0_i32 = arith.constant 0 : i32
    %c0_i32_0 = arith.constant 0 : i32
    return %arg1, %c0_i32 : i32, i32
  }
  func.func @transform_1(%arg0: i32, %arg1: i32, %arg2: memref<4xi32, #tpu.memory_space<smem>>) -> (i32, i32) {
    %c0_i32 = arith.constant 0 : i32
    %c0_i32_0 = arith.constant 0 : i32
    return %arg0, %c0_i32 : i32, i32
  }
  func.func @transform_2(%arg0: i32, %arg1: i32, %arg2: memref<4xi32, #tpu.memory_space<smem>>) -> (i32, i32) {
    %c0_i32 = arith.constant 0 : i32
    %c0_i32_0 = arith.constant 0 : i32
    return %arg0, %c0_i32 : i32, i32
  }
  func.func @transform_3(%arg0: i32, %arg1: i32, %arg2: memref<4xi32, #tpu.memory_space<smem>>) -> (i32, i32) {
    %c0_i32 = arith.constant 0 : i32
    %c0_i32_0 = arith.constant 0 : i32
    return %c0_i32, %arg0 : i32, i32
  }
  func.func @transform_4(%arg0: i32, %arg1: i32, %arg2: memref<4xi32, #tpu.memory_space<smem>>) -> (i32, i32) {
    %c0_i32 = arith.constant 0 : i32
    %c0_i32_0 = arith.constant 0 : i32
    return %c0_i32, %arg0 : i32, i32
  }
  func.func @transform_5(%arg0: i32, %arg1: i32, %arg2: memref<4xi32, #tpu.memory_space<smem>>) -> (i32, i32, i32) {
    %0 = arith.index_cast %arg1 : i32 to index
    %1 = memref.load %arg2[%0] : memref<4xi32, #tpu.memory_space<smem>>
    %c0_i32 = arith.constant 0 : i32
    %c0_i32_0 = arith.constant 0 : i32
    return %1, %arg0, %c0_i32 : i32, i32, i32
  }
  func.func @transform_6(%arg0: i32, %arg1: i32, %arg2: memref<4xi32, #tpu.memory_space<smem>>) -> (i32, i32, i32) {
    %0 = arith.index_cast %arg1 : i32 to index
    %1 = memref.load %arg2[%0] : memref<4xi32, #tpu.memory_space<smem>>
    %c0_i32 = arith.constant 0 : i32
    %c0_i32_0 = arith.constant 0 : i32
    return %1, %arg0, %c0_i32 : i32, i32, i32
  }
  func.func @transform_7(%arg0: i32, %arg1: i32, %arg2: memref<4xi32, #tpu.memory_space<smem>>) -> (i32, i32, i32) {
    %0 = arith.index_cast %arg1 : i32 to index
    %1 = memref.load %arg2[%0] : memref<4xi32, #tpu.memory_space<smem>>
    %c0_i32 = arith.constant 0 : i32
    %c0_i32_0 = arith.constant 0 : i32
    return %1, %c0_i32, %arg0 : i32, i32, i32
  }
  func.func @transform_8(%arg0: i32, %arg1: i32, %arg2: memref<4xi32, #tpu.memory_space<smem>>) -> (i32, i32, i32) {
    %0 = arith.index_cast %arg1 : i32 to index
    %1 = memref.load %arg2[%0] : memref<4xi32, #tpu.memory_space<smem>>
    %c0_i32 = arith.constant 0 : i32
    %c0_i32_0 = arith.constant 0 : i32
    return %1, %c0_i32, %arg0 : i32, i32, i32
  }
  func.func @transform_9(%arg0: i32, %arg1: i32, %arg2: memref<4xi32, #tpu.memory_space<smem>>) -> (i32, i32) {
    %c0_i32 = arith.constant 0 : i32
    %c0_i32_0 = arith.constant 0 : i32
    %c0_i32_1 = arith.constant 0 : i32
    return %c0_i32, %c0_i32_0 : i32, i32
  }
  func.func @transform_10(%arg0: i32, %arg1: i32, %arg2: memref<4xi32, #tpu.memory_space<smem>>) -> (i32, i32, i32) {
    %c0_i32 = arith.constant 0 : i32
    %c0_i32_0 = arith.constant 0 : i32
    return %arg1, %arg0, %c0_i32 : i32, i32, i32
  }
  func.func @transform_11(%arg0: i32, %arg1: i32, %arg2: memref<4xi32, #tpu.memory_space<smem>>) -> (i32, i32) {
    %c0_i32 = arith.constant 0 : i32
    return %arg1, %arg0 : i32, i32
  }
  func.func @transform_12(%arg0: i32, %arg1: i32, %arg2: memref<4xi32, #tpu.memory_space<smem>>) -> (i32, i32) {
    %c0_i32 = arith.constant 0 : i32
    return %arg1, %arg0 : i32, i32
  }
}

</mosaic_0001>

<llo_original>
// kernel: tpu_custom_call.1
$region0: #{tpu_custom_call.1}
  #allocation0 [shape = 'u32[]', space=smem, size = 0x4, offset = 0x4, fixed_abs, tag = 'smem constant byte address 0x4 - core index']
  #allocation1 [shape = 'u32[144,128]{1,0:T(1,128)}', space=vmem, size = 0x12000, scoped, tag = 'internal scratch']
  #allocation2 [shape = 's32[1]{0}', space=sflag, size = 0x4, scoped, tag = 'scoped memory for tpu_custom_call.1']
  #allocation3 [shape = 'u8[512]{0}', space=smem, size = 0x200, scoped, tag = 'prefetched SMEM operand 0']
  %s0 = inlined_call_operand.vmem [shape: s32[4], index: 0, kind: input, shape index: {}]
  %s1 = inlined_call_operand.vmem [shape: f32[32,16], index: 1, kind: input, shape index: {}]
  %s2 = inlined_call_operand.vmem [shape: f32[32,16], index: 2, kind: input, shape index: {}]
  %s3 = inlined_call_operand.vmem [shape: f32[32,16], index: 3, kind: input, shape index: {}]
  %s4 = inlined_call_operand.vmem [shape: f32[1,32], index: 4, kind: input, shape index: {}]
  %s5 = inlined_call_operand.vmem [shape: f32[1,32], index: 5, kind: input, shape index: {}]
  %s6 = inlined_call_operand.vmem [shape: f32[3,32,16], index: 6, kind: input, shape index: {}]
  %s7 = inlined_call_operand.vmem [shape: f32[3,32,16], index: 7, kind: input, shape index: {}]
  %s8 = inlined_call_operand.vmem [shape: f32[3,1,32], index: 8, kind: input, shape index: {}]
  %s9 = inlined_call_operand.vmem [shape: f32[3,1,32], index: 9, kind: input, shape index: {}]
  %s10 = inlined_call_operand.vmem [shape: f32[1,16], index: 10, kind: input, shape index: {}]
  %s11 = inlined_call_operand.vmem [shape: f32[32,32,16], index: 11, kind: input, shape index: {}]
  %s12 = inlined_call_operand.vmem [shape: f32[32,32], index: 12, kind: input, shape index: {}]
  %s13 = inlined_call_operand.hbm [shape: f32[32,32], index: 13, kind: output, shape index: {}]
  %s14 = sld [smem:[#allocation0]]
  $region81: #{tpu_custom_call.1} parent=0
    _
  %s16 = ssub.s32 1, %s14
  %s17 = scalar_select 0, %s16, %s14
  %s18 = sshll.u32 %s0, 4
  %s19 = int_to_ptr.vmem [resolvable:$true] %s18
  %21 = dma.vmem_to_smem %s19, 16, [#allocation3], [#allocation2]
  %22 = dma.done [#allocation2], 16
  %23 = sfence
  $region1: #{tpu_custom_call.1} parent=0
    #allocation4 [shape = 'u8[8192]{0}', space=vmem, size = 0x2000, scoped, tag = 'output window, operand 0']
    #allocation5 [shape = 's32[2]{0}', space=sflag, size = 0x8, scoped, tag = 'scoped memory for tpu_custom_call.1']
    %24 = vsyncpa [#allocation5], 0
    %s25 = scalar_lea.sflag [#allocation5], 1
    %26 = vsyncpa %s25, 0
    loop: start=0, step=1, limit=6
    $region2: #{tpu_custom_call.1} parent=1 // loop_pre_header
      _
    $region3: #{tpu_custom_call.1} parent=1 // loop_header
      %s28 = sphi 0, %s32
      %p29 = scmp.ge.s32.totalorder %s28, 6
      %s35 = sphi 0, %s47
      %s36 = sphi 0, %s43
      %s37 = sphi 0, %s35
      %s38 = sphi 0, %s36
      %s39 = sphi 0, %s37
      %s40 = sphi 0, %s38
      %s50 = sphi 0, %s52
      %s53 = sphi 0, %s50
      %s54 = sphi 0, %s53
      %s70 = sphi 0, %s54
      %s76 = sphi 0, %s78
      %s79 = sphi 0, %s76
      %s80 = sphi 0, %s79
      %s96 = sphi 0, %s80
      %s102 = sphi 0, %s104
      %s105 = sphi 0, %s102
      %s106 = sphi 0, %s105
      %s122 = sphi 0, %s106
      %s128 = sphi 0, %s130
      %s131 = sphi 0, %s128
      %s132 = sphi 0, %s131
      %s148 = sphi 0, %s132
      %s154 = sphi 0, %s156
      %s157 = sphi 0, %s154
      %s158 = sphi 0, %s157
      %s174 = sphi 0, %s158
      %s184 = sphi 0, %s186
      %s187 = sphi 0, %s184
      %s188 = sphi 0, %s187
      %s204 = sphi 0, %s188
      %s214 = sphi 0, %s216
      %s217 = sphi 0, %s214
      %s218 = sphi 0, %s217
      %s234 = sphi 0, %s218
      %s244 = sphi 0, %s246
      %s247 = sphi 0, %s244
      %s248 = sphi 0, %s247
      %s264 = sphi 0, %s248
      %s274 = sphi 0, %s276
      %s277 = sphi 0, %s274
      %s278 = sphi 0, %s277
      %s294 = sphi 0, %s278
      %s298 = sphi 0, %s298
      %s300 = sphi 0, %s298
      %s301 = sphi 0, %s300
      %s315 = sphi 0, %s301
      %s323 = sphi 0, %s325
      %s326 = sphi 0, %s323
      %s327 = sphi 0, %s326
      %s343 = sphi 0, %s327
      %s351 = sphi 0, %s353
      %s354 = sphi 0, %s351
      %s355 = sphi 0, %s354
      %s371 = sphi 0, %s355
      %s379 = sphi 0, %s381
      %s382 = sphi 0, %s379
      %s383 = sphi 0, %s382
      %s399 = sphi 0, %s383
    $region4: #{tpu_custom_call.1} parent=1 // loop_header_branch
      %31 = sbr.rel (%p29) target = $region8
    $region5: #{tpu_custom_call.1} parent=1 // loop_body
      %s33 = ssub.s32 %s28, 1
      %s34 = ssub.s32 %s28, 2
      %s41 = sadd.s32 1, %s36
      %p42 = scmp.ge.s32.totalorder %s41, 4
      %s43 = scalar_select %p42, 0, %s41
      %s44 = sadd.s32 1, %s35
      %s45 = scalar_select %p42, %s44, %s35
      %p46 = scmp.ge.s32.totalorder %s45, 1
      %s47 = scalar_select %p46, 0, %s45
      %s48 = ssub.s32 %s36, %s43
      %p49 = scmp.eq.s32.totalorder %s48, 0
      %s51 = sadd.s32 %s50, 1
      %s52 = scalar_select %p49, %s50, %s51
      %p55 = pneg %p49
      %p56 = scmp.eq.s32.totalorder %s28, 3
      %p57 = por %p55, %p56
      %p58 = scmp.ne.s32.totalorder %s50, %s53
      %p59 = scmp.eq.s32.totalorder %s28, 0
      %p60 = por %p58, %p59
      %p61 = scmp.ne.s32.totalorder %s50, %s53
      %p62 = scmp.eq.s32.totalorder %s33, 3
      %p63 = por %p61, %p62
      %p64 = scmp.ne.s32.totalorder %s53, %s54
      %p65 = scmp.eq.s32.totalorder %s33, 0
      %p66 = por %p64, %p65
      %p67 = scmp.ne.s32.totalorder %s53, %s54
      %p68 = scmp.eq.s32.totalorder %s34, 3
      %p69 = por %p67, %p68
      %p71 = scmp.ne.s32.totalorder %s54, %s70
      %p72 = scmp.eq.s32.totalorder %s34, 0
      %p73 = por %p71, %p72
      %s74 = ssub.s32 %s35, %s47
      %p75 = scmp.eq.s32.totalorder %s74, 0
      %s77 = sadd.s32 %s76, 1
      %s78 = scalar_select %p75, %s76, %s77
      %p81 = pneg %p75
      %p82 = scmp.eq.s32.totalorder %s28, 3
      %p83 = por %p81, %p82
      %p84 = scmp.ne.s32.totalorder %s76, %s79
      %p85 = scmp.eq.s32.totalorder %s28, 0
      %p86 = por %p84, %p85
      %p87 = scmp.ne.s32.totalorder %s76, %s79
      %p88 = scmp.eq.s32.totalorder %s33, 3
      %p89 = por %p87, %p88
      %p90 = scmp.ne.s32.totalorder %s79, %s80
      %p91 = scmp.eq.s32.totalorder %s33, 0
      %p92 = por %p90, %p91
      %p93 = scmp.ne.s32.totalorder %s79, %s80
      %p94 = scmp.eq.s32.totalorder %s34, 3
      %p95 = por %p93, %p94
      %p97 = scmp.ne.s32.totalorder %s80, %s96
      %p98 = scmp.eq.s32.totalorder %s34, 0
      %p99 = por %p97, %p98
      %s100 = ssub.s32 %s35, %s47
      %p101 = scmp.eq.s32.totalorder %s100, 0
      %s103 = sadd.s32 %s102, 1
      %s104 = scalar_select %p101, %s102, %s103
      %p107 = pneg %p101
      %p108 = scmp.eq.s32.totalorder %s28, 3
      %p109 = por %p107, %p108
      %p110 = scmp.ne.s32.totalorder %s102, %s105
      %p111 = scmp.eq.s32.totalorder %s28, 0
      %p112 = por %p110, %p111
      %p113 = scmp.ne.s32.totalorder %s102, %s105
      %p114 = scmp.eq.s32.totalorder %s33, 3
      %p115 = por %p113, %p114
      %p116 = scmp.ne.s32.totalorder %s105, %s106
      %p117 = scmp.eq.s32.totalorder %s33, 0
      %p118 = por %p116, %p117
      %p119 = scmp.ne.s32.totalorder %s105, %s106
      %p120 = scmp.eq.s32.totalorder %s34, 3
      %p121 = por %p119, %p120
      %p123 = scmp.ne.s32.totalorder %s106, %s122
      %p124 = scmp.eq.s32.totalorder %s34, 0
      %p125 = por %p123, %p124
      %s126 = ssub.s32 %s35, %s47
      %p127 = scmp.eq.s32.totalorder %s126, 0
      %s129 = sadd.s32 %s128, 1
      %s130 = scalar_select %p127, %s128, %s129
      %p133 = pneg %p127
      %p134 = scmp.eq.s32.totalorder %s28, 3
      %p135 = por %p133, %p134
      %p136 = scmp.ne.s32.totalorder %s128, %s131
      %p137 = scmp.eq.s32.totalorder %s28, 0
      %p138 = por %p136, %p137
      %p139 = scmp.ne.s32.totalorder %s128, %s131
      %p140 = scmp.eq.s32.totalorder %s33, 3
      %p141 = por %p139, %p140
      %p142 = scmp.ne.s32.totalorder %s131, %s132
      %p143 = scmp.eq.s32.totalorder %s33, 0
      %p144 = por %p142, %p143
      %p145 = scmp.ne.s32.totalorder %s131, %s132
      %p146 = scmp.eq.s32.totalorder %s34, 3
      %p147 = por %p145, %p146
      %p149 = scmp.ne.s32.totalorder %s132, %s148
      %p150 = scmp.eq.s32.totalorder %s34, 0
      %p151 = por %p149, %p150
      %s152 = ssub.s32 %s35, %s47
      %p153 = scmp.eq.s32.totalorder %s152, 0
      %s155 = sadd.s32 %s154, 1
      %s156 = scalar_select %p153, %s154, %s155
      %p159 = pneg %p153
      %p160 = scmp.eq.s32.totalorder %s28, 3
      %p161 = por %p159, %p160
      %p162 = scmp.ne.s32.totalorder %s154, %s157
      %p163 = scmp.eq.s32.totalorder %s28, 0
      %p164 = por %p162, %p163
      %p165 = scmp.ne.s32.totalorder %s154, %s157
      %p166 = scmp.eq.s32.totalorder %s33, 3
      %p167 = por %p165, %p166
      %p168 = scmp.ne.s32.totalorder %s157, %s158
      %p169 = scmp.eq.s32.totalorder %s33, 0
      %p170 = por %p168, %p169
      %p171 = scmp.ne.s32.totalorder %s157, %s158
      %p172 = scmp.eq.s32.totalorder %s34, 3
      %p173 = por %p171, %p172
      %p175 = scmp.ne.s32.totalorder %s158, %s174
      %p176 = scmp.eq.s32.totalorder %s34, 0
      %p177 = por %p175, %p176
      %s178 = sld [smem:[#allocation3 + %s36]]
      %s179 = sld [smem:[#allocation3 + %s43]]
      %s180 = ssub.s32 %s178, %s179
      %s181 = ssub.s32 %s35, %s47
      %s182 = sor.u32 %s180, %s181
      %p183 = scmp.eq.s32.totalorder %s182, 0
      %s185 = sadd.s32 %s184, 1
      %s186 = scalar_select %p183, %s184, %s185
      %p189 = pneg %p183
      %p190 = scmp.eq.s32.totalorder %s28, 3
      %p191 = por %p189, %p190
      %p192 = scmp.ne.s32.totalorder %s184, %s187
      %p193 = scmp.eq.s32.totalorder %s28, 0
      %p194 = por %p192, %p193
      %p195 = scmp.ne.s32.totalorder %s184, %s187
      %p196 = scmp.eq.s32.totalorder %s33, 3
      %p197 = por %p195, %p196
      %p198 = scmp.ne.s32.totalorder %s187, %s188
      %p199 = scmp.eq.s32.totalorder %s33, 0
      %p200 = por %p198, %p199
      %p201 = scmp.ne.s32.totalorder %s187, %s188
      %p202 = scmp.eq.s32.totalorder %s34, 3
      %p203 = por %p201, %p202
      %p205 = scmp.ne.s32.totalorder %s188, %s204
      %p206 = scmp.eq.s32.totalorder %s34, 0
      %p207 = por %p205, %p206
      %s208 = sld [smem:[#allocation3 + %s36]]
      %s209 = sld [smem:[#allocation3 + %s43]]
      %s210 = ssub.s32 %s208, %s209
      %s211 = ssub.s32 %s35, %s47
      %s212 = sor.u32 %s210, %s211
      %p213 = scmp.eq.s32.totalorder %s212, 0
      %s215 = sadd.s32 %s214, 1
      %s216 = scalar_select %p213, %s214, %s215
      %p219 = pneg %p213
      %p220 = scmp.eq.s32.totalorder %s28, 3
      %p221 = por %p219, %p220
      %p222 = scmp.ne.s32.totalorder %s214, %s217
      %p223 = scmp.eq.s32.totalorder %s28, 0
      %p224 = por %p222, %p223
      %p225 = scmp.ne.s32.totalorder %s214, %s217
      %p226 = scmp.eq.s32.totalorder %s33, 3
      %p227 = por %p225, %p226
      %p228 = scmp.ne.s32.totalorder %s217, %s218
      %p229 = scmp.eq.s32.totalorder %s33, 0
      %p230 = por %p228, %p229
      %p231 = scmp.ne.s32.totalorder %s217, %s218
      %p232 = scmp.eq.s32.totalorder %s34, 3
      %p233 = por %p231, %p232
      %p235 = scmp.ne.s32.totalorder %s218, %s234
      %p236 = scmp.eq.s32.totalorder %s34, 0
      %p237 = por %p235, %p236
      %s238 = sld [smem:[#allocation3 + %s36]]
      %s239 = sld [smem:[#allocation3 + %s43]]
      %s240 = ssub.s32 %s238, %s239
      %s241 = ssub.s32 %s35, %s47
      %s242 = sor.u32 %s240, %s241
      %p243 = scmp.eq.s32.totalorder %s242, 0
      %s245 = sadd.s32 %s244, 1
      %s246 = scalar_select %p243, %s244, %s245
      %p249 = pneg %p243
      %p250 = scmp.eq.s32.totalorder %s28, 3
      %p251 = por %p249, %p250
      %p252 = scmp.ne.s32.totalorder %s244, %s247
      %p253 = scmp.eq.s32.totalorder %s28, 0
      %p254 = por %p252, %p253
      %p255 = scmp.ne.s32.totalorder %s244, %s247
      %p256 = scmp.eq.s32.totalorder %s33, 3
      %p257 = por %p255, %p256
      %p258 = scmp.ne.s32.totalorder %s247, %s248
      %p259 = scmp.eq.s32.totalorder %s33, 0
      %p260 = por %p258, %p259
      %p261 = scmp.ne.s32.totalorder %s247, %s248
      %p262 = scmp.eq.s32.totalorder %s34, 3
      %p263 = por %p261, %p262
      %p265 = scmp.ne.s32.totalorder %s248, %s264
      %p266 = scmp.eq.s32.totalorder %s34, 0
      %p267 = por %p265, %p266
      %s268 = sld [smem:[#allocation3 + %s36]]
      %s269 = sld [smem:[#allocation3 + %s43]]
      %s270 = ssub.s32 %s268, %s269
      %s271 = ssub.s32 %s35, %s47
      %s272 = sor.u32 %s270, %s271
      %p273 = scmp.eq.s32.totalorder %s272, 0
      %s275 = sadd.s32 %s274, 1
      %s276 = scalar_select %p273, %s274, %s275
      %p279 = pneg %p273
      %p280 = scmp.eq.s32.totalorder %s28, 3
      %p281 = por %p279, %p280
      %p282 = scmp.ne.s32.totalorder %s274, %s277
      %p283 = scmp.eq.s32.totalorder %s28, 0
      %p284 = por %p282, %p283
      %p285 = scmp.ne.s32.totalorder %s274, %s277
      %p286 = scmp.eq.s32.totalorder %s33, 3
      %p287 = por %p285, %p286
      %p288 = scmp.ne.s32.totalorder %s277, %s278
      %p289 = scmp.eq.s32.totalorder %s33, 0
      %p290 = por %p288, %p289
      %p291 = scmp.ne.s32.totalorder %s277, %s278
      %p292 = scmp.eq.s32.totalorder %s34, 3
      %p293 = por %p291, %p292
      %p295 = scmp.ne.s32.totalorder %s278, %s294
      %p296 = scmp.eq.s32.totalorder %s34, 0
      %p297 = por %p295, %p296
      %s299 = sadd.s32 %s298, 1
      %p302 = scmp.eq.s32.totalorder %s28, 3
      %p303 = scmp.ne.s32.totalorder %s298, %s300
      %p304 = scmp.eq.s32.totalorder %s28, 0
      %p305 = por %p303, %p304
      %p306 = scmp.ne.s32.totalorder %s298, %s300
      %p307 = scmp.eq.s32.totalorder %s33, 3
      %p308 = por %p306, %p307
      %p309 = scmp.ne.s32.totalorder %s300, %s301
      %p310 = scmp.eq.s32.totalorder %s33, 0
      %p311 = por %p309, %p310
      %p312 = scmp.ne.s32.totalorder %s300, %s301
      %p313 = scmp.eq.s32.totalorder %s34, 3
      %p314 = por %p312, %p313
      %p316 = scmp.ne.s32.totalorder %s301, %s315
      %p317 = scmp.eq.s32.totalorder %s34, 0
      %p318 = por %p316, %p317
      %s319 = ssub.s32 %s36, %s43
      %s320 = ssub.s32 %s35, %s47
      %s321 = sor.u32 %s319, %s320
      %p322 = scmp.eq.s32.totalorder %s321, 0
      %s324 = sadd.s32 %s323, 1
      %s325 = scalar_select %p322, %s323, %s324
      %p328 = pneg %p322
      %p329 = scmp.eq.s32.totalorder %s28, 3
      %p330 = por %p328, %p329
      %p331 = scmp.ne.s32.totalorder %s323, %s326
      %p332 = scmp.eq.s32.totalorder %s28, 0
      %p333 = por %p331, %p332
      %p334 = scmp.ne.s32.totalorder %s323, %s326
      %p335 = scmp.eq.s32.totalorder %s33, 3
      %p336 = por %p334, %p335
      %p337 = scmp.ne.s32.totalorder %s326, %s327
      %p338 = scmp.eq.s32.totalorder %s33, 0
      %p339 = por %p337, %p338
      %p340 = scmp.ne.s32.totalorder %s326, %s327
      %p341 = scmp.eq.s32.totalorder %s34, 3
      %p342 = por %p340, %p341
      %p344 = scmp.ne.s32.totalorder %s327, %s343
      %p345 = scmp.eq.s32.totalorder %s34, 0
      %p346 = por %p344, %p345
      %s347 = ssub.s32 %s36, %s43
      %s348 = ssub.s32 %s35, %s47
      %s349 = sor.u32 %s347, %s348
      %p350 = scmp.eq.s32.totalorder %s349, 0
      %s352 = sadd.s32 %s351, 1
      %s353 = scalar_select %p350, %s351, %s352
      %p356 = pneg %p350
      %p357 = scmp.eq.s32.totalorder %s28, 3
      %p358 = por %p356, %p357
      %p359 = scmp.ne.s32.totalorder %s351, %s354
      %p360 = scmp.eq.s32.totalorder %s28, 0
      %p361 = por %p359, %p360
      %p362 = scmp.ne.s32.totalorder %s351, %s354
      %p363 = scmp.eq.s32.totalorder %s33, 3
      %p364 = por %p362, %p363
      %p365 = scmp.ne.s32.totalorder %s354, %s355
      %p366 = scmp.eq.s32.totalorder %s33, 0
      %p367 = por %p365, %p366
      %p368 = scmp.ne.s32.totalorder %s354, %s355
      %p369 = scmp.eq.s32.totalorder %s34, 3
      %p370 = por %p368, %p369
      %p372 = scmp.ne.s32.totalorder %s355, %s371
      %p373 = scmp.eq.s32.totalorder %s34, 0
      %p374 = por %p372, %p373
      %s375 = ssub.s32 %s36, %s43
      %s376 = ssub.s32 %s35, %s47
      %s377 = sor.u32 %s375, %s376
      %p378 = scmp.eq.s32.totalorder %s377, 0
      %s380 = sadd.s32 %s379, 1
      %s381 = scalar_select %p378, %s379, %s380
      %p384 = pneg %p378
      %p385 = scmp.eq.s32.totalorder %s28, 3
      %p386 = por %p384, %p385
      %p387 = scmp.ne.s32.totalorder %s379, %s382
      %p388 = scmp.eq.s32.totalorder %s28, 0
      %p389 = por %p387, %p388
      %p390 = scmp.ne.s32.totalorder %s379, %s382
      %p391 = scmp.eq.s32.totalorder %s33, 3
      %p392 = por %p390, %p391
      %p393 = scmp.ne.s32.totalorder %s382, %s383
      %p394 = scmp.eq.s32.totalorder %s33, 0
      %p395 = por %p393, %p394
      %p396 = scmp.ne.s32.totalorder %s382, %s383
      %p397 = scmp.eq.s32.totalorder %s34, 3
      %p398 = por %p396, %p397
      %p400 = scmp.ne.s32.totalorder %s383, %s399
      %p401 = scmp.eq.s32.totalorder %s34, 0
      %p402 = por %p400, %p401
      %p403 = scmp.le.s32.totalorder 1, %s28
      %p404 = scmp.lt.s32.totalorder %s28, 5
      %p405 = pnand %p403, %p404
      %p406 = pneg %p405
      // Predicated region
      $region9: #{tpu_custom_call.1} parent=5 // pred_check
        _
      $region10: #{tpu_custom_call.1} parent=5 // pred_check_branch
        %408 = sbr.rel (%p405) target = $region12
      $region11: #{tpu_custom_call.1} parent=5 // pred_region
        %s409 = ssub.s32 %s28, 1
        // Predicated region
        $region13: #{tpu_custom_call.1} parent=11 // pred_check
          %p410 = pneg %p92
        $region14: #{tpu_custom_call.1} parent=11 // pred_check_branch
          %412 = sbr.rel (%p410) target = $region16
        $region15: #{tpu_custom_call.1} parent=11 // pred_region
          %s413 = smul.u32 4, %s37
          %p414 = scmp.lt.s32.totalorder %s413, 3
          %s415 = scalar_select %p414, %s413, 3
          %s416 = smul.addr %s415, 8
          %s417 = scalar_lea.vmem %s2, %s416
          %s418 = smul.u32 4, %s37
        $region16: #{tpu_custom_call.1} parent=11 // pred_fallthru
          _
        // Predicated region
        $region17: #{tpu_custom_call.1} parent=11 // pred_check
          %p419 = pneg %p118
        $region18: #{tpu_custom_call.1} parent=11 // pred_check_branch
          %421 = sbr.rel (%p419) target = $region20
        $region19: #{tpu_custom_call.1} parent=11 // pred_region
          %s422 = smul.u32 4, %s37
          %p423 = scmp.lt.s32.totalorder %s422, 3
          %s424 = scalar_select %p423, %s422, 3
          %s425 = smul.addr %s424, 8
          %s426 = scalar_lea.vmem %s3, %s425
          %s427 = smul.u32 4, %s37
        $region20: #{tpu_custom_call.1} parent=11 // pred_fallthru
          _
        // Predicated region
        $region21: #{tpu_custom_call.1} parent=11 // pred_check
          %p428 = pneg %p144
        $region22: #{tpu_custom_call.1} parent=11 // pred_check_branch
          %430 = sbr.rel (%p428) target = $region24
        $region23: #{tpu_custom_call.1} parent=11 // pred_region
          %p431 = scmp.lt.s32.totalorder %s37, 0
          %s432 = scalar_select %p431, %s37, 0
          %s433 = scalar_lea.vmem %s4, %s432
        $region24: #{tpu_custom_call.1} parent=11 // pred_fallthru
          _
        // Predicated region
        $region25: #{tpu_custom_call.1} parent=11 // pred_check
          %p434 = pneg %p170
        $region26: #{tpu_custom_call.1} parent=11 // pred_check_branch
          %436 = sbr.rel (%p434) target = $region28
        $region27: #{tpu_custom_call.1} parent=11 // pred_region
          %p437 = scmp.lt.s32.totalorder %s37, 0
          %s438 = scalar_select %p437, %s37, 0
          %s439 = scalar_lea.vmem %s5, %s438
        $region28: #{tpu_custom_call.1} parent=11 // pred_fallthru
          _
        // Predicated region
        $region29: #{tpu_custom_call.1} parent=11 // pred_check
          %p440 = pneg %p311
        $region30: #{tpu_custom_call.1} parent=11 // pred_check_branch
          %442 = sbr.rel (%p440) target = $region32
        $region31: #{tpu_custom_call.1} parent=11 // pred_region
          _
        $region32: #{tpu_custom_call.1} parent=11 // pred_fallthru
          _
      $region12: #{tpu_custom_call.1} parent=5 // pred_fallthru
        _
      %p443 = scmp.lt.s32.totalorder %s28, 4
      // Predicated region
      $region33: #{tpu_custom_call.1} parent=5 // pred_check
        %p444 = pneg %p443
      $region34: #{tpu_custom_call.1} parent=5 // pred_check_branch
        %446 = sbr.rel (%p444) target = $region36
      $region35: #{tpu_custom_call.1} parent=5 // pred_region
        // Predicated region
        $region37: #{tpu_custom_call.1} parent=35 // pred_check
          %p447 = pneg %p60
        $region38: #{tpu_custom_call.1} parent=35 // pred_check_branch
          %449 = sbr.rel (%p447) target = $region40
        $region39: #{tpu_custom_call.1} parent=35 // pred_region
          %p450 = scmp.lt.s32.totalorder %s36, 3
          %s451 = scalar_select %p450, %s36, 3
          %s452 = smul.addr %s451, 8
          %s453 = scalar_lea.vmem %s1, %s452
        $region40: #{tpu_custom_call.1} parent=35 // pred_fallthru
          _
        // Predicated region
        $region41: #{tpu_custom_call.1} parent=35 // pred_check
          %p454 = pneg %p194
        $region42: #{tpu_custom_call.1} parent=35 // pred_check_branch
          %456 = sbr.rel (%p454) target = $region44
        $region43: #{tpu_custom_call.1} parent=35 // pred_region
          %s457 = sld [smem:[#allocation3 + %s36]]
          %s458 = smul.u32 4, %s35
          %p459 = scmp.lt.s32.totalorder %s457, 2
          %s460 = scalar_select %p459, %s457, 2
          %p461 = scmp.lt.s32.totalorder %s458, 3
          %s462 = scalar_select %p461, %s458, 3
          %s463 = smul.addr %s460, 4
          %s464 = sadd.s32 %s462, %s463
          %s465 = smul.addr %s464, 8
          %s466 = scalar_lea.vmem %s6, %s465
          %s467 = sld [smem:[#allocation3 + %s36]]
          %s468 = smul.u32 4, %s35
        $region44: #{tpu_custom_call.1} parent=35 // pred_fallthru
          _
        // Predicated region
        $region45: #{tpu_custom_call.1} parent=35 // pred_check
          %p469 = pneg %p224
        $region46: #{tpu_custom_call.1} parent=35 // pred_check_branch
          %471 = sbr.rel (%p469) target = $region48
        $region47: #{tpu_custom_call.1} parent=35 // pred_region
          %s472 = sld [smem:[#allocation3 + %s36]]
          %s473 = smul.u32 4, %s35
          %p474 = scmp.lt.s32.totalorder %s472, 2
          %s475 = scalar_select %p474, %s472, 2
          %p476 = scmp.lt.s32.totalorder %s473, 3
          %s477 = scalar_select %p476, %s473, 3
          %s478 = smul.addr %s475, 4
          %s479 = sadd.s32 %s477, %s478
          %s480 = smul.addr %s479, 8
          %s481 = scalar_lea.vmem %s7, %s480
          %s482 = sld [smem:[#allocation3 + %s36]]
          %s483 = smul.u32 4, %s35
        $region48: #{tpu_custom_call.1} parent=35 // pred_fallthru
          _
        // Predicated region
        $region49: #{tpu_custom_call.1} parent=35 // pred_check
          %p484 = pneg %p254
        $region50: #{tpu_custom_call.1} parent=35 // pred_check_branch
          %486 = sbr.rel (%p484) target = $region52
        $region51: #{tpu_custom_call.1} parent=35 // pred_region
          %s487 = sld [smem:[#allocation3 + %s36]]
          %p488 = scmp.lt.s32.totalorder %s487, 2
          %s489 = scalar_select %p488, %s487, 2
          %p490 = scmp.lt.s32.totalorder %s35, 0
          %s491 = scalar_select %p490, %s35, 0
          %s492 = sadd.s32 %s491, %s489
          %s493 = scalar_lea.vmem %s8, %s492
          %s494 = sld [smem:[#allocation3 + %s36]]
        $region52: #{tpu_custom_call.1} parent=35 // pred_fallthru
          _
        // Predicated region
        $region53: #{tpu_custom_call.1} parent=35 // pred_check
          %p495 = pneg %p284
        $region54: #{tpu_custom_call.1} parent=35 // pred_check_branch
          %497 = sbr.rel (%p495) target = $region56
        $region55: #{tpu_custom_call.1} parent=35 // pred_region
          %s498 = sld [smem:[#allocation3 + %s36]]
          %p499 = scmp.lt.s32.totalorder %s498, 2
          %s500 = scalar_select %p499, %s498, 2
          %p501 = scmp.lt.s32.totalorder %s35, 0
          %s502 = scalar_select %p501, %s35, 0
          %s503 = sadd.s32 %s502, %s500
          %s504 = scalar_lea.vmem %s9, %s503
          %s505 = sld [smem:[#allocation3 + %s36]]
        $region56: #{tpu_custom_call.1} parent=35 // pred_fallthru
          _
        // Predicated region
        $region57: #{tpu_custom_call.1} parent=35 // pred_check
          %p506 = pneg %p333
        $region58: #{tpu_custom_call.1} parent=35 // pred_check_branch
          %508 = sbr.rel (%p506) target = $region60
        $region59: #{tpu_custom_call.1} parent=35 // pred_region
          %s509 = smul.u32 8, %s36
          %s510 = smul.u32 4, %s35
          %p511 = scmp.lt.s32.totalorder %s509, 31
          %s512 = scalar_select %p511, %s509, 31
          %p513 = scmp.lt.s32.totalorder %s510, 3
          %s514 = scalar_select %p513, %s510, 3
          %s515 = smul.addr %s512, 4
          %s516 = sadd.s32 %s514, %s515
          %s517 = smul.addr %s516, 8
          %s518 = scalar_lea.vmem %s11, %s517
          %s519 = smul.u32 8, %s36
          %s520 = smul.u32 4, %s35
        $region60: #{tpu_custom_call.1} parent=35 // pred_fallthru
          _
        // Predicated region
        $region61: #{tpu_custom_call.1} parent=35 // pred_check
          %p521 = pneg %p361
        $region62: #{tpu_custom_call.1} parent=35 // pred_check_branch
          %523 = sbr.rel (%p521) target = $region64
        $region63: #{tpu_custom_call.1} parent=35 // pred_region
          %p524 = scmp.lt.s32.totalorder %s36, 3
          %s525 = scalar_select %p524, %s36, 3
          %p526 = scmp.lt.s32.totalorder %s35, 0
          %s527 = scalar_select %p526, %s35, 0
          %s528 = sadd.s32 %s527, %s525
          %s529 = smul.addr %s528, 8
          %s530 = scalar_lea.vmem %s12, %s529
        $region64: #{tpu_custom_call.1} parent=35 // pred_fallthru
          _
      $region36: #{tpu_custom_call.1} parent=5 // pred_fallthru
        _
      %p531 = scmp.le.s32.totalorder 1, %s28
      %p532 = scmp.lt.s32.totalorder %s28, 5
      %p533 = pnand %p531, %p532
      %p534 = pneg %p533
      // Predicated region
      $region65: #{tpu_custom_call.1} parent=5 // pred_check
        _
      $region66: #{tpu_custom_call.1} parent=5 // pred_check_branch
        %536 = sbr.rel (%p533) target = $region68
      $region67: #{tpu_custom_call.1} parent=5 // pred_region
        %s537 = ssub.s32 %s28, 1
        %p538 = scmp.lt.s32.totalorder %s38, 3
        %s539 = scalar_select %p538, %s38, 3
        %s540 = smul.addr %s539, 8
        %s541 = scalar_lea.vmem %s1, %s540
        %p542 = pneg %p66
        %p543 = pneg %p63
        %s544 = smul.u32 4, %s37
        %p545 = scmp.lt.s32.totalorder %s544, 3
        %s546 = scalar_select %p545, %s544, 3
        %s547 = smul.addr %s546, 8
        %s548 = scalar_lea.vmem %s2, %s547
        %p549 = pneg %p92
        %p550 = pneg %p89
        %s551 = smul.u32 4, %s37
        %p552 = scmp.lt.s32.totalorder %s551, 3
        %s553 = scalar_select %p552, %s551, 3
        %s554 = smul.addr %s553, 8
        %s555 = scalar_lea.vmem %s3, %s554
        %p556 = pneg %p118
        %p557 = pneg %p115
        %p558 = scmp.lt.s32.totalorder %s37, 0
        %s559 = scalar_select %p558, %s37, 0
        %s560 = scalar_lea.vmem %s4, %s559
        %p561 = pneg %p144
        %p562 = pneg %p141
        %p563 = scmp.lt.s32.totalorder %s37, 0
        %s564 = scalar_select %p563, %s37, 0
        %s565 = scalar_lea.vmem %s5, %s564
        %p566 = pneg %p170
        %p567 = pneg %p167
        %s568 = sld [smem:[#allocation3 + %s38]]
        %s569 = smul.u32 4, %s37
        %p570 = scmp.lt.s32.totalorder %s568, 2
        %s571 = scalar_select %p570, %s568, 2
        %p572 = scmp.lt.s32.totalorder %s569, 3
        %s573 = scalar_select %p572, %s569, 3
        %s574 = smul.addr %s571, 4
        %s575 = sadd.s32 %s573, %s574
        %s576 = smul.addr %s575, 8
        %s577 = scalar_lea.vmem %s6, %s576
        %p578 = pneg %p200
        %p579 = pneg %p197
        %s580 = sld [smem:[#allocation3 + %s38]]
        %s581 = smul.u32 4, %s37
        %p582 = scmp.lt.s32.totalorder %s580, 2
        %s583 = scalar_select %p582, %s580, 2
        %p584 = scmp.lt.s32.totalorder %s581, 3
        %s585 = scalar_select %p584, %s581, 3
        %s586 = smul.addr %s583, 4
        %s587 = sadd.s32 %s585, %s586
        %s588 = smul.addr %s587, 8
        %s589 = scalar_lea.vmem %s7, %s588
        %p590 = pneg %p230
        %p591 = pneg %p227
        %s592 = sld [smem:[#allocation3 + %s38]]
        %p593 = scmp.lt.s32.totalorder %s592, 2
        %s594 = scalar_select %p593, %s592, 2
        %p595 = scmp.lt.s32.totalorder %s37, 0
        %s596 = scalar_select %p595, %s37, 0
        %s597 = sadd.s32 %s596, %s594
        %s598 = scalar_lea.vmem %s8, %s597
        %p599 = pneg %p260
        %p600 = pneg %p257
        %s601 = sld [smem:[#allocation3 + %s38]]
        %p602 = scmp.lt.s32.totalorder %s601, 2
        %s603 = scalar_select %p602, %s601, 2
        %p604 = scmp.lt.s32.totalorder %s37, 0
        %s605 = scalar_select %p604, %s37, 0
        %s606 = sadd.s32 %s605, %s603
        %s607 = scalar_lea.vmem %s9, %s606
        %p608 = pneg %p290
        %p609 = pneg %p287
        %p610 = pneg %p311
        %p611 = pneg %p308
        %s612 = smul.u32 8, %s38
        %s613 = smul.u32 4, %s37
        %p614 = scmp.lt.s32.totalorder %s612, 31
        %s615 = scalar_select %p614, %s612, 31
        %p616 = scmp.lt.s32.totalorder %s613, 3
        %s617 = scalar_select %p616, %s613, 3
        %s618 = smul.addr %s615, 4
        %s619 = sadd.s32 %s617, %s618
        %s620 = smul.addr %s619, 8
        %s621 = scalar_lea.vmem %s11, %s620
        %p622 = pneg %p339
        %p623 = pneg %p336
        %p624 = scmp.lt.s32.totalorder %s38, 3
        %s625 = scalar_select %p624, %s38, 3
        %p626 = scmp.lt.s32.totalorder %s37, 0
        %s627 = scalar_select %p626, %s37, 0
        %s628 = sadd.s32 %s627, %s625
        %s629 = smul.addr %s628, 8
        %s630 = scalar_lea.vmem %s12, %s629
        %p631 = pneg %p367
        %p632 = pneg %p364
        %p633 = pneg %p395
        %p634 = pneg %p392
        %s635 = sand.u32 %s382, 1
        %s636 = scalar_lea.sflag [#allocation5], %s635
        %s637 = sand.u32 %s382, 1
        %s638 = smul.addr %s637, 8
        %s639 = scalar_lea.vmem [#allocation4], %s638
        %p640 = scmp.lt.s32.totalorder %s38, 3
        %s641 = scalar_select %p640, %s38, 3
        %s642 = smul.addr %s641, 8
        %s643 = scalar_lea.vmem %s1, %s642
        %s644 = smul.u32 4, %s37
        %p645 = scmp.lt.s32.totalorder %s644, 3
        %s646 = scalar_select %p645, %s644, 3
        %s647 = smul.addr %s646, 8
        %s648 = scalar_lea.vmem %s2, %s647
        %s649 = smul.u32 4, %s37
        %s650 = smul.u32 4, %s37
        %p651 = scmp.lt.s32.totalorder %s650, 3
        %s652 = scalar_select %p651, %s650, 3
        %s653 = smul.addr %s652, 8
        %s654 = scalar_lea.vmem %s3, %s653
        %s655 = smul.u32 4, %s37
        %p656 = scmp.lt.s32.totalorder %s37, 0
        %s657 = scalar_select %p656, %s37, 0
        %s658 = scalar_lea.vmem %s4, %s657
        %p659 = scmp.lt.s32.totalorder %s37, 0
        %s660 = scalar_select %p659, %s37, 0
        %s661 = scalar_lea.vmem %s5, %s660
        %s662 = sld [smem:[#allocation3 + %s38]]
        %s663 = smul.u32 4, %s37
        %p664 = scmp.lt.s32.totalorder %s662, 2
        %s665 = scalar_select %p664, %s662, 2
        %p666 = scmp.lt.s32.totalorder %s663, 3
        %s667 = scalar_select %p666, %s663, 3
        %s668 = smul.addr %s665, 4
        %s669 = sadd.s32 %s667, %s668
        %s670 = smul.addr %s669, 8
        %s671 = scalar_lea.vmem %s6, %s670
        %s672 = sld [smem:[#allocation3 + %s38]]
        %s673 = smul.u32 4, %s37
        %s674 = sld [smem:[#allocation3 + %s38]]
        %s675 = smul.u32 4, %s37
        %p676 = scmp.lt.s32.totalorder %s674, 2
        %s677 = scalar_select %p676, %s674, 2
        %p678 = scmp.lt.s32.totalorder %s675, 3
        %s679 = scalar_select %p678, %s675, 3
        %s680 = smul.addr %s677, 4
        %s681 = sadd.s32 %s679, %s680
        %s682 = smul.addr %s681, 8
        %s683 = scalar_lea.vmem %s7, %s682
        %s684 = sld [smem:[#allocation3 + %s38]]
        %s685 = smul.u32 4, %s37
        %s686 = sld [smem:[#allocation3 + %s38]]
        %p687 = scmp.lt.s32.totalorder %s686, 2
        %s688 = scalar_select %p687, %s686, 2
        %p689 = scmp.lt.s32.totalorder %s37, 0
        %s690 = scalar_select %p689, %s37, 0
        %s691 = sadd.s32 %s690, %s688
        %s692 = scalar_lea.vmem %s8, %s691
        %s693 = sld [smem:[#allocation3 + %s38]]
        %s694 = sld [smem:[#allocation3 + %s38]]
        %p695 = scmp.lt.s32.totalorder %s694, 2
        %s696 = scalar_select %p695, %s694, 2
        %p697 = scmp.lt.s32.totalorder %s37, 0
        %s698 = scalar_select %p697, %s37, 0
        %s699 = sadd.s32 %s698, %s696
        %s700 = scalar_lea.vmem %s9, %s699
        %s701 = sld [smem:[#allocation3 + %s38]]
        %s702 = smul.u32 8, %s38
        %s703 = smul.u32 4, %s37
        %p704 = scmp.lt.s32.totalorder %s702, 31
        %s705 = scalar_select %p704, %s702, 31
        %p706 = scmp.lt.s32.totalorder %s703, 3
        %s707 = scalar_select %p706, %s703, 3
        %s708 = smul.addr %s705, 4
        %s709 = sadd.s32 %s707, %s708
        %s710 = smul.addr %s709, 8
        %s711 = scalar_lea.vmem %s11, %s710
        %s712 = smul.u32 8, %s38
        %s713 = smul.u32 4, %s37
        %p714 = scmp.lt.s32.totalorder %s38, 3
        %s715 = scalar_select %p714, %s38, 3
        %p716 = scmp.lt.s32.totalorder %s37, 0
        %s717 = scalar_select %p716, %s37, 0
        %s718 = sadd.s32 %s717, %s715
        %s719 = smul.addr %s718, 8
        %s720 = scalar_lea.vmem %s12, %s719
        %v721 = vld [vmem:[%s711] sm:$0xff]
        %v722 = vld [vmem:[%s711 + $0x8] sm:$0xff]
        %v723 = vld [vmem:[%s711 + $0x10] sm:$0xff]
        %v724 = vld [vmem:[%s711 + $0x18] sm:$0xff]
        %v725 = vld [vmem:[%s711 + $0x20] sm:$0xff]
        %v726 = vld [vmem:[%s711 + $0x28] sm:$0xff]
        %v727 = vld [vmem:[%s711 + $0x30] sm:$0xff]
        %v728 = vld [vmem:[%s711 + $0x38] sm:$0xff]
        %v729 = vld [vmem:[%s711 + $0x40] sm:$0xff]
        %v730 = vld [vmem:[%s711 + $0x48] sm:$0xff]
        %v731 = vld [vmem:[%s711 + $0x50] sm:$0xff]
        %v732 = vld [vmem:[%s711 + $0x58] sm:$0xff]
        %v733 = vld [vmem:[%s711 + $0x60] sm:$0xff]
        %v734 = vld [vmem:[%s711 + $0x68] sm:$0xff]
        %v735 = vld [vmem:[%s711 + $0x70] sm:$0xff]
        %v736 = vld [vmem:[%s711 + $0x78] sm:$0xff]
        %v737 = vld [vmem:[%s711 + $0x80] sm:$0xff]
        %v738 = vld [vmem:[%s711 + $0x88] sm:$0xff]
        %v739 = vld [vmem:[%s711 + $0x90] sm:$0xff]
        %v740 = vld [vmem:[%s711 + $0x98] sm:$0xff]
        %v741 = vld [vmem:[%s711 + $0xa0] sm:$0xff]
        %v742 = vld [vmem:[%s711 + $0xa8] sm:$0xff]
        %v743 = vld [vmem:[%s711 + $0xb0] sm:$0xff]
        %v744 = vld [vmem:[%s711 + $0xb8] sm:$0xff]
        %v745 = vld [vmem:[%s711 + $0xc0] sm:$0xff]
        %v746 = vld [vmem:[%s711 + $0xc8] sm:$0xff]
        %v747 = vld [vmem:[%s711 + $0xd0] sm:$0xff]
        %v748 = vld [vmem:[%s711 + $0xd8] sm:$0xff]
        %v749 = vld [vmem:[%s711 + $0xe0] sm:$0xff]
        %v750 = vld [vmem:[%s711 + $0xe8] sm:$0xff]
        %v751 = vld [vmem:[%s711 + $0xf0] sm:$0xff]
        %v752 = vld [vmem:[%s711 + $0xf8] sm:$0xff]
        %v753 = vld [vmem:[%s720] sm:$0xff]
        %v754 = vld [vmem:[%s648] sm:$0xff]
        %v755 = vld [vmem:[%s648 + $0x8] sm:$0xff]
        %v756 = vld [vmem:[%s648 + $0x10] sm:$0xff]
        %v757 = vld [vmem:[%s648 + $0x18] sm:$0xff]
        %v758 = vld [vmem:[%s654] sm:$0xff]
        %v759 = vld [vmem:[%s654 + $0x8] sm:$0xff]
        %v760 = vld [vmem:[%s654 + $0x10] sm:$0xff]
        %v761 = vld [vmem:[%s654 + $0x18] sm:$0xff]
        %v762 = vld [vmem:[%s671] sm:$0xff]
        %v763 = vld [vmem:[%s671 + $0x8] sm:$0xff]
        %v764 = vld [vmem:[%s671 + $0x10] sm:$0xff]
        %v765 = vld [vmem:[%s671 + $0x18] sm:$0xff]
        %v766 = vld [vmem:[%s683] sm:$0xff]
        %v767 = vld [vmem:[%s683 + $0x8] sm:$0xff]
        %v768 = vld [vmem:[%s683 + $0x10] sm:$0xff]
        %v769 = vld [vmem:[%s683 + $0x18] sm:$0xff]
        %v770 = vmul.f32 %v758, %v762
        %v771 = vmul.f32 %v759, %v763
        %v772 = vmul.f32 %v760, %v764
        %v773 = vmul.f32 %v761, %v765
        %v774 = vadd.f32 %v754, %v770
        %v775 = vadd.f32 %v755, %v771
        %v776 = vadd.f32 %v756, %v772
        %v777 = vadd.f32 %v757, %v773
        %v778 = vmul.f32 %v758, %v766
        %v779 = vmul.f32 %v759, %v767
        %v780 = vmul.f32 %v760, %v768
        %v781 = vmul.f32 %v761, %v769
        %v782 = vld [vmem:[%s643] sm:$0xff]
        %v783 = vld [vmem:[%s10] sm:$0x1]
        %v785 = vlaneseq
        %v786 = vshrl.u32 %v785, 7
        %v787 = vsub.s32 0, %v786
        %v788 = vrot.slane %v783, %v787
        %v790 = vmul.f32 %v782, %v788
        %v792 = vcombine.high %v790, %v790
        %v794 = vunpack.c.l.s4 1966171168
        %v795 = vunpack.c.0.s8 %v794
        %v796 = vlaneseq
        %v797 = vshrl.u32 %v796, 7
        %v798 = vsub.s32 %v795, %v797
        %v799 = vrot.slane %v790, %v798
        %v801 = vunpack.c.l.s4 1966171168
        %v802 = vunpack.c.0.s8 %v801
        %v803 = vlaneseq
        %v804 = vshrl.u32 %v803, 7
        %v805 = vsub.s32 %v802, %v804
        %v806 = vrot.slane %v792, %v805
        %v807 = vcombine.high %v799, %v799
        %v808 = vcombine.high %v806, %v806
        %v810 = vunpack.c.l.s4 1966171168
        %v811 = vunpack.c.0.s8 %v810
        %v812 = vlaneseq
        %v813 = vshrl.u32 %v812, 7
        %v814 = vsub.s32 %v811, %v813
        %v815 = vrot.slane %v799, %v814
        %v817 = vunpack.c.l.s4 1966171168
        %v818 = vunpack.c.0.s8 %v817
        %v819 = vlaneseq
        %v820 = vshrl.u32 %v819, 7
        %v821 = vsub.s32 %v818, %v820
        %v822 = vrot.slane %v806, %v821
        %v824 = vunpack.c.l.s4 1966171168
        %v825 = vunpack.c.0.s8 %v824
        %v826 = vlaneseq
        %v827 = vshrl.u32 %v826, 7
        %v828 = vsub.s32 %v825, %v827
        %v829 = vrot.slane %v807, %v828
        %v831 = vunpack.c.l.s4 1966171168
        %v832 = vunpack.c.0.s8 %v831
        %v833 = vlaneseq
        %v834 = vshrl.u32 %v833, 7
        %v835 = vsub.s32 %v832, %v834
        %v836 = vrot.slane %v808, %v835
        %v837 = vcombine.high %v815, %v815
        %v838 = vcombine.high %v822, %v822
        %v839 = vcombine.high %v829, %v829
        %v840 = vcombine.high %v836, %v836
        %v841 = vmul.f32 %v778, %v721
        %v842 = vmul.f32 %v779, %v722
        %v843 = vmul.f32 %v780, %v723
        %v844 = vmul.f32 %v781, %v724
        %v845 = vmul.f32 %v778, %v725
        %v846 = vmul.f32 %v779, %v726
        %v847 = vmul.f32 %v780, %v727
        %v848 = vmul.f32 %v781, %v728
        %v849 = vmul.f32 %v778, %v729
        %v850 = vmul.f32 %v779, %v730
        %v851 = vmul.f32 %v780, %v731
        %v852 = vmul.f32 %v781, %v732
        %v853 = vmul.f32 %v778, %v733
        %v854 = vmul.f32 %v779, %v734
        %v855 = vmul.f32 %v780, %v735
        %v856 = vmul.f32 %v781, %v736
        %v857 = vmul.f32 %v778, %v737
        %v858 = vmul.f32 %v779, %v738
        %v859 = vmul.f32 %v780, %v739
        %v860 = vmul.f32 %v781, %v740
        %v861 = vmul.f32 %v778, %v741
        %v862 = vmul.f32 %v779, %v742
        %v863 = vmul.f32 %v780, %v743
        %v864 = vmul.f32 %v781, %v744
        %v865 = vmul.f32 %v778, %v745
        %v866 = vmul.f32 %v779, %v746
        %v867 = vmul.f32 %v780, %v747
        %v868 = vmul.f32 %v781, %v748
        %v869 = vmul.f32 %v778, %v749
        %v870 = vmul.f32 %v779, %v750
        %v871 = vmul.f32 %v780, %v751
        %v872 = vmul.f32 %v781, %v752
        %v873 = vlaneseq
        %v874 = vshrl.u32 %v873, 7
        %v875 = vsub.s32 0, %v874
        %v876 = vrot.slane %v815, %v875
        %v877 = vlaneseq
        %v878 = vshrl.u32 %v877, 7
        %v879 = vsub.s32 0, %v878
        %v880 = vrot.slane %v829, %v879
        %v881 = vlaneseq
        %v882 = vshrl.u32 %v881, 7
        %v883 = vsub.s32 0, %v882
        %v884 = vrot.slane %v837, %v883
        %v885 = vlaneseq
        %v886 = vshrl.u32 %v885, 7
        %v887 = vsub.s32 0, %v886
        %v888 = vrot.slane %v839, %v887
        %v889 = vlaneseq
        %v890 = vshrl.u32 %v889, 7
        %v891 = vsub.s32 0, %v890
        %v892 = vrot.slane %v822, %v891
        %v893 = vlaneseq
        %v894 = vshrl.u32 %v893, 7
        %v895 = vsub.s32 0, %v894
        %v896 = vrot.slane %v836, %v895
        %v897 = vlaneseq
        %v898 = vshrl.u32 %v897, 7
        %v899 = vsub.s32 0, %v898
        %v900 = vrot.slane %v838, %v899
        %v901 = vlaneseq
        %v902 = vshrl.u32 %v901, 7
        %v903 = vsub.s32 0, %v902
        %v904 = vrot.slane %v840, %v903
        %v913 = vmul.f32 %v876, %v841
        %v914 = vmul.f32 %v876, %v842
        %v915 = vmul.f32 %v876, %v843
        %v916 = vmul.f32 %v876, %v844
        %v917 = vmul.f32 %v880, %v845
        %v918 = vmul.f32 %v880, %v846
        %v919 = vmul.f32 %v880, %v847
        %v920 = vmul.f32 %v880, %v848
        %v921 = vmul.f32 %v884, %v849
        %v922 = vmul.f32 %v884, %v850
        %v923 = vmul.f32 %v884, %v851
        %v924 = vmul.f32 %v884, %v852
        %v925 = vmul.f32 %v888, %v853
        %v926 = vmul.f32 %v888, %v854
        %v927 = vmul.f32 %v888, %v855
        %v928 = vmul.f32 %v888, %v856
        %v929 = vmul.f32 %v892, %v857
        %v930 = vmul.f32 %v892, %v858
        %v931 = vmul.f32 %v892, %v859
        %v932 = vmul.f32 %v892, %v860
        %v933 = vmul.f32 %v896, %v861
        %v934 = vmul.f32 %v896, %v862
        %v935 = vmul.f32 %v896, %v863
        %v936 = vmul.f32 %v896, %v864
        %v937 = vmul.f32 %v900, %v865
        %v938 = vmul.f32 %v900, %v866
        %v939 = vmul.f32 %v900, %v867
        %v940 = vmul.f32 %v900, %v868
        %v941 = vmul.f32 %v904, %v869
        %v942 = vmul.f32 %v904, %v870
        %v943 = vmul.f32 %v904, %v871
        %v944 = vmul.f32 %v904, %v872
        %vm945 = vcmask 130048
        %v946 = vsel %vm945, %v913, 0.0
        %947 = vadd.xlane.f32.xlu0 %v946
        %v948 = vpop.xlane.xlu0 %947
        %v949 = vsel %vm945, %v914, 0.0
        %950 = vadd.xlane.f32.xlu0 %v949
        %v951 = vpop.xlane.xlu0 %950
        %v952 = vsel %vm945, %v915, 0.0
        %953 = vadd.xlane.f32.xlu0 %v952
        %v954 = vpop.xlane.xlu0 %953
        %v955 = vsel %vm945, %v916, 0.0
        %956 = vadd.xlane.f32.xlu0 %v955
        %v957 = vpop.xlane.xlu0 %956
        %v958 = vsel %vm945, %v917, 0.0
        %959 = vadd.xlane.f32.xlu0 %v958
        %v960 = vpop.xlane.xlu0 %959
        %v961 = vsel %vm945, %v918, 0.0
        %962 = vadd.xlane.f32.xlu0 %v961
        %v963 = vpop.xlane.xlu0 %962
        %v964 = vsel %vm945, %v919, 0.0
        %965 = vadd.xlane.f32.xlu0 %v964
        %v966 = vpop.xlane.xlu0 %965
        %v967 = vsel %vm945, %v920, 0.0
        %968 = vadd.xlane.f32.xlu0 %v967
        %v969 = vpop.xlane.xlu0 %968
        %v970 = vsel %vm945, %v921, 0.0
        %971 = vadd.xlane.f32.xlu0 %v970
        %v972 = vpop.xlane.xlu0 %971
        %v973 = vsel %vm945, %v922, 0.0
        %974 = vadd.xlane.f32.xlu0 %v973
        %v975 = vpop.xlane.xlu0 %974
        %v976 = vsel %vm945, %v923, 0.0
        %977 = vadd.xlane.f32.xlu0 %v976
        %v978 = vpop.xlane.xlu0 %977
        %v979 = vsel %vm945, %v924, 0.0
        %980 = vadd.xlane.f32.xlu0 %v979
        %v981 = vpop.xlane.xlu0 %980
        %v982 = vsel %vm945, %v925, 0.0
        %983 = vadd.xlane.f32.xlu0 %v982
        %v984 = vpop.xlane.xlu0 %983
        %v985 = vsel %vm945, %v926, 0.0
        %986 = vadd.xlane.f32.xlu0 %v985
        %v987 = vpop.xlane.xlu0 %986
        %v988 = vsel %vm945, %v927, 0.0
        %989 = vadd.xlane.f32.xlu0 %v988
        %v990 = vpop.xlane.xlu0 %989
        %v991 = vsel %vm945, %v928, 0.0
        %992 = vadd.xlane.f32.xlu0 %v991
        %v993 = vpop.xlane.xlu0 %992
        %v994 = vsel %vm945, %v929, 0.0
        %995 = vadd.xlane.f32.xlu0 %v994
        %v996 = vpop.xlane.xlu0 %995
        %v997 = vsel %vm945, %v930, 0.0
        %998 = vadd.xlane.f32.xlu0 %v997
        %v999 = vpop.xlane.xlu0 %998
        %v1000 = vsel %vm945, %v931, 0.0
        %1001 = vadd.xlane.f32.xlu0 %v1000
        %v1002 = vpop.xlane.xlu0 %1001
        %v1003 = vsel %vm945, %v932, 0.0
        %1004 = vadd.xlane.f32.xlu0 %v1003
        %v1005 = vpop.xlane.xlu0 %1004
        %v1006 = vsel %vm945, %v933, 0.0
        %1007 = vadd.xlane.f32.xlu0 %v1006
        %v1008 = vpop.xlane.xlu0 %1007
        %v1009 = vsel %vm945, %v934, 0.0
        %1010 = vadd.xlane.f32.xlu0 %v1009
        %v1011 = vpop.xlane.xlu0 %1010
        %v1012 = vsel %vm945, %v935, 0.0
        %1013 = vadd.xlane.f32.xlu0 %v1012
        %v1014 = vpop.xlane.xlu0 %1013
        %v1015 = vsel %vm945, %v936, 0.0
        %1016 = vadd.xlane.f32.xlu0 %v1015
        %v1017 = vpop.xlane.xlu0 %1016
        %v1018 = vsel %vm945, %v937, 0.0
        %1019 = vadd.xlane.f32.xlu0 %v1018
        %v1020 = vpop.xlane.xlu0 %1019
        %v1021 = vsel %vm945, %v938, 0.0
        %1022 = vadd.xlane.f32.xlu0 %v1021
        %v1023 = vpop.xlane.xlu0 %1022
        %v1024 = vsel %vm945, %v939, 0.0
        %1025 = vadd.xlane.f32.xlu0 %v1024
        %v1026 = vpop.xlane.xlu0 %1025
        %v1027 = vsel %vm945, %v940, 0.0
        %1028 = vadd.xlane.f32.xlu0 %v1027
        %v1029 = vpop.xlane.xlu0 %1028
        %v1030 = vsel %vm945, %v941, 0.0
        %1031 = vadd.xlane.f32.xlu0 %v1030
        %v1032 = vpop.xlane.xlu0 %1031
        %v1033 = vsel %vm945, %v942, 0.0
        %1034 = vadd.xlane.f32.xlu0 %v1033
        %v1035 = vpop.xlane.xlu0 %1034
        %v1036 = vsel %vm945, %v943, 0.0
        %1037 = vadd.xlane.f32.xlu0 %v1036
        %v1038 = vpop.xlane.xlu0 %1037
        %v1039 = vsel %vm945, %v944, 0.0
        %1040 = vadd.xlane.f32.xlu0 %v1039
        %v1041 = vpop.xlane.xlu0 %1040
        %v1074 = vlaneseq
        %v1075 = vand.u32 %v1074, 127
        %v1076 = vlaneseq
        %v1077 = vshrl.u32 %v1076, 7
        %v1078 = vsub.s32 %v1075, %v1077
        %v1079 = vrot.slane %v948, %v1078
        %v1080 = vadd.s32 %v1075, 4294967288
        %v1081 = vlaneseq
        %v1082 = vshrl.u32 %v1081, 7
        %v1083 = vsub.s32 %v1080, %v1082
        %v1084 = vrot.slane %v951, %v1083
        %vm1085 = vcmask 130112
        %v1086 = vsel %vm1085, %v1084, %v1079
        %v1087 = vadd.s32 %v1075, 4294967280
        %v1088 = vlaneseq
        %v1089 = vshrl.u32 %v1088, 7
        %v1090 = vsub.s32 %v1087, %v1089
        %v1091 = vrot.slane %v954, %v1090
        %vm1092 = vcmask 195712
        %v1093 = vsel %vm1092, %v1091, %v1086
        %v1094 = vadd.s32 %v1075, 4294967272
        %v1095 = vlaneseq
        %v1096 = vshrl.u32 %v1095, 7
        %v1097 = vsub.s32 %v1094, %v1096
        %v1098 = vrot.slane %v957, %v1097
        %vm1099 = vcmask 261312
        %v1100 = vsel %vm1099, %v1098, %v1093
        %v1101 = vlaneseq
        %v1102 = vshrl.u32 %v1101, 7
        %v1103 = vsub.s32 %v1075, %v1102
        %v1104 = vrot.slane %v960, %v1103
        %v1105 = vlaneseq
        %v1106 = vshrl.u32 %v1105, 7
        %v1107 = vsub.s32 %v1080, %v1106
        %v1108 = vrot.slane %v963, %v1107
        %v1109 = vsel %vm1085, %v1108, %v1104
        %v1110 = vlaneseq
        %v1111 = vshrl.u32 %v1110, 7
        %v1112 = vsub.s32 %v1087, %v1111
        %v1113 = vrot.slane %v966, %v1112
        %v1114 = vsel %vm1092, %v1113, %v1109
        %v1115 = vlaneseq
        %v1116 = vshrl.u32 %v1115, 7
        %v1117 = vsub.s32 %v1094, %v1116
        %v1118 = vrot.slane %v969, %v1117
        %v1119 = vsel %vm1099, %v1118, %v1114
        %v1120 = vlaneseq
        %v1121 = vshrl.u32 %v1120, 7
        %v1122 = vsub.s32 %v1075, %v1121
        %v1123 = vrot.slane %v972, %v1122
        %v1124 = vlaneseq
        %v1125 = vshrl.u32 %v1124, 7
        %v1126 = vsub.s32 %v1080, %v1125
        %v1127 = vrot.slane %v975, %v1126
        %v1128 = vsel %vm1085, %v1127, %v1123
        %v1129 = vlaneseq
        %v1130 = vshrl.u32 %v1129, 7
        %v1131 = vsub.s32 %v1087, %v1130
        %v1132 = vrot.slane %v978, %v1131
        %v1133 = vsel %vm1092, %v1132, %v1128
        %v1134 = vlaneseq
        %v1135 = vshrl.u32 %v1134, 7
        %v1136 = vsub.s32 %v1094, %v1135
        %v1137 = vrot.slane %v981, %v1136
        %v1138 = vsel %vm1099, %v1137, %v1133
        %v1139 = vlaneseq
        %v1140 = vshrl.u32 %v1139, 7
        %v1141 = vsub.s32 %v1075, %v1140
        %v1142 = vrot.slane %v984, %v1141
        %v1143 = vlaneseq
        %v1144 = vshrl.u32 %v1143, 7
        %v1145 = vsub.s32 %v1080, %v1144
        %v1146 = vrot.slane %v987, %v1145
        %v1147 = vsel %vm1085, %v1146, %v1142
        %v1148 = vlaneseq
        %v1149 = vshrl.u32 %v1148, 7
        %v1150 = vsub.s32 %v1087, %v1149
        %v1151 = vrot.slane %v990, %v1150
        %v1152 = vsel %vm1092, %v1151, %v1147
        %v1153 = vlaneseq
        %v1154 = vshrl.u32 %v1153, 7
        %v1155 = vsub.s32 %v1094, %v1154
        %v1156 = vrot.slane %v993, %v1155
        %v1157 = vsel %vm1099, %v1156, %v1152
        %v1158 = vlaneseq
        %v1159 = vshrl.u32 %v1158, 7
        %v1160 = vsub.s32 %v1075, %v1159
        %v1161 = vrot.slane %v996, %v1160
        %v1162 = vlaneseq
        %v1163 = vshrl.u32 %v1162, 7
        %v1164 = vsub.s32 %v1080, %v1163
        %v1165 = vrot.slane %v999, %v1164
        %v1166 = vsel %vm1085, %v1165, %v1161
        %v1167 = vlaneseq
        %v1168 = vshrl.u32 %v1167, 7
        %v1169 = vsub.s32 %v1087, %v1168
        %v1170 = vrot.slane %v1002, %v1169
        %v1171 = vsel %vm1092, %v1170, %v1166
        %v1172 = vlaneseq
        %v1173 = vshrl.u32 %v1172, 7
        %v1174 = vsub.s32 %v1094, %v1173
        %v1175 = vrot.slane %v1005, %v1174
        %v1176 = vsel %vm1099, %v1175, %v1171
        %v1177 = vlaneseq
        %v1178 = vshrl.u32 %v1177, 7
        %v1179 = vsub.s32 %v1075, %v1178
        %v1180 = vrot.slane %v1008, %v1179
        %v1181 = vlaneseq
        %v1182 = vshrl.u32 %v1181, 7
        %v1183 = vsub.s32 %v1080, %v1182
        %v1184 = vrot.slane %v1011, %v1183
        %v1185 = vsel %vm1085, %v1184, %v1180
        %v1186 = vlaneseq
        %v1187 = vshrl.u32 %v1186, 7
        %v1188 = vsub.s32 %v1087, %v1187
        %v1189 = vrot.slane %v1014, %v1188
        %v1190 = vsel %vm1092, %v1189, %v1185
        %v1191 = vlaneseq
        %v1192 = vshrl.u32 %v1191, 7
        %v1193 = vsub.s32 %v1094, %v1192
        %v1194 = vrot.slane %v1017, %v1193
        %v1195 = vsel %vm1099, %v1194, %v1190
        %v1196 = vlaneseq
        %v1197 = vshrl.u32 %v1196, 7
        %v1198 = vsub.s32 %v1075, %v1197
        %v1199 = vrot.slane %v1020, %v1198
        %v1200 = vlaneseq
        %v1201 = vshrl.u32 %v1200, 7
        %v1202 = vsub.s32 %v1080, %v1201
        %v1203 = vrot.slane %v1023, %v1202
        %v1204 = vsel %vm1085, %v1203, %v1199
        %v1205 = vlaneseq
        %v1206 = vshrl.u32 %v1205, 7
        %v1207 = vsub.s32 %v1087, %v1206
        %v1208 = vrot.slane %v1026, %v1207
        %v1209 = vsel %vm1092, %v1208, %v1204
        %v1210 = vlaneseq
        %v1211 = vshrl.u32 %v1210, 7
        %v1212 = vsub.s32 %v1094, %v1211
        %v1213 = vrot.slane %v1029, %v1212
        %v1214 = vsel %vm1099, %v1213, %v1209
        %v1215 = vlaneseq
        %v1216 = vshrl.u32 %v1215, 7
        %v1217 = vsub.s32 %v1075, %v1216
        %v1218 = vrot.slane %v1032, %v1217
        %v1219 = vlaneseq
        %v1220 = vshrl.u32 %v1219, 7
        %v1221 = vsub.s32 %v1080, %v1220
        %v1222 = vrot.slane %v1035, %v1221
        %v1223 = vsel %vm1085, %v1222, %v1218
        %v1224 = vlaneseq
        %v1225 = vshrl.u32 %v1224, 7
        %v1226 = vsub.s32 %v1087, %v1225
        %v1227 = vrot.slane %v1038, %v1226
        %v1228 = vsel %vm1092, %v1227, %v1223
        %v1229 = vlaneseq
        %v1230 = vshrl.u32 %v1229, 7
        %v1231 = vsub.s32 %v1094, %v1230
        %v1232 = vrot.slane %v1041, %v1231
        %v1233 = vsel %vm1099, %v1232, %v1228
        %vm1234 = vcmask 1041409
        %v1235 = vsel %vm1234, %v1119, %v1100
        %vm1236 = vcmask 1042434
        %v1237 = vsel %vm1236, %v1138, %v1235
        %vm1238 = vcmask 1043459
        %v1239 = vsel %vm1238, %v1157, %v1237
        %vm1240 = vcmask 1044484
        %v1241 = vsel %vm1240, %v1176, %v1239
        %vm1242 = vcmask 1045509
        %v1243 = vsel %vm1242, %v1195, %v1241
        %vm1244 = vcmask 1046534
        %v1245 = vsel %vm1244, %v1214, %v1243
        %vm1246 = vcmask 1047559
        %v1247 = vsel %vm1246, %v1233, %v1245
        %v1249 = vsel %vm945, %v790, 0
        %v1252 = vsel %vm945, %v774, 0
        %v1255 = vsel %vm945, %v775, 0
        %v1258 = vsel %vm945, %v776, 0
        %v1261 = vsel %vm945, %v777, 0
        %1263 = vmatprep.subr.mxu0 0.0
        %1264 = vmatpush1.xpose.msra.mxu0 %v1252
        %1265 = vmatprep.subr.mxu0 0.0
        %1266 = vmatpush1.xpose.msra.mxu0 %v1255
        %1267 = vmatprep.subr.mxu0 0.0
        %1268 = vmatpush1.xpose.msra.mxu0 %v1258
        %1269 = vmatprep.subr.mxu0 0.0
        %1270 = vmatpush1.xpose.msra.mxu0 %v1261
        %1271 = vmatprep.subr.mxu0 0.0
        %1272 = vmatpush1.xpose.msra.mxu0 0.0
        %1273 = vmatprep.subr.mxu0 0.0
        %1274 = vmatpush1.xpose.msra.mxu0 0.0
        %1275 = vmatprep.subr.mxu0 0.0
        %1276 = vmatpush1.xpose.msra.mxu0 0.0
        %1277 = vmatprep.subr.mxu0 0.0
        %1278 = vmatpush1.xpose.msra.mxu0 0.0
        %1279 = vmatprep.subr.mxu0 0.0
        %1280 = vmatpush1.xpose.msra.mxu0 0.0
        %1281 = vmatprep.subr.mxu0 0.0
        %1282 = vmatpush1.xpose.msra.mxu0 0.0
        %1283 = vmatprep.subr.mxu0 0.0
        %1284 = vmatpush1.xpose.msra.mxu0 0.0
        %1285 = vmatprep.subr.mxu0 0.0
        %1286 = vmatpush1.xpose.msra.mxu0 0.0
        %1287 = vmatprep.subr.mxu0 0.0
        %1288 = vmatpush1.xpose.msra.mxu0 0.0
        %1289 = vmatprep.subr.mxu0 0.0
        %1290 = vmatpush1.xpose.msra.mxu0 0.0
        %1291 = vmatprep.subr.mxu0 0.0
        %1292 = vmatpush1.xpose.msra.mxu0 0.0
        %1293 = vmatprep.subr.mxu0 0.0
        %1294 = vmatpush1.xpose.msra.mxu0 0.0
        %1295 = vmatprep.subr.mxu0 0.0
        %1296 = vmatpush1.xpose.msra.mxu0 0.0
        %1297 = vmatprep.subr.mxu0 0.0
        %1298 = vmatpush1.xpose.msra.mxu0 0.0
        %1299 = vmatprep.subr.mxu0 0.0
        %1300 = vmatpush1.xpose.msra.mxu0 0.0
        %1301 = vmatprep.subr.mxu0 0.0
        %1302 = vmatpush1.xpose.msra.mxu0 0.0
        %1303 = vmatprep.subr.mxu0 0.0
        %1304 = vmatpush1.xpose.msra.mxu0 0.0
        %1305 = vmatprep.subr.mxu0 0.0
        %1306 = vmatpush1.xpose.msra.mxu0 0.0
        %1307 = vmatprep.subr.mxu0 0.0
        %1308 = vmatpush1.xpose.msra.mxu0 0.0
        %1309 = vmatprep.subr.mxu0 0.0
        %1310 = vmatpush1.xpose.msra.mxu0 0.0
        %1311 = vmatprep.subr.mxu0 0.0
        %1312 = vmatpush1.xpose.msra.mxu0 0.0
        %1313 = vmatprep.subr.mxu0 0.0
        %1314 = vmatpush1.xpose.msra.mxu0 0.0
        %1315 = vmatprep.subr.mxu0 0.0
        %1316 = vmatpush1.xpose.msra.mxu0 0.0
        %1317 = vmatprep.subr.mxu0 0.0
        %1318 = vmatpush1.xpose.msra.mxu0 0.0
        %1319 = vmatprep.subr.mxu0 0.0
        %1320 = vmatpush1.xpose.msra.mxu0 0.0
        %1321 = vmatprep.subr.mxu0 0.0
        %1322 = vmatpush1.xpose.msra.mxu0 0.0
        %1323 = vmatprep.subr.mxu0 0.0
        %1324 = vmatpush1.xpose.msra.mxu0 0.0
        %1325 = vmatprep.subr.mxu0 0.0
        %1326 = vmatpush1.xpose.msra.mxu0 0.0
        %1327 = vmatprep.mubr.f32.mxu0 0.0
        %1328 = vmatmul.mubr.f32.gmra.mrb[0].mxu0 %v1249
        %v1329 = vpop.f32.mrb[0].mxu0
        %v1330 = vadd.f32 %v1247, %v1329
        %v1331 = vpop.f32.mrb[0].mxu0
        %1332 = vdwg.mxu0
        %v1333 = vld [vmem:[%s658] sm:$0x1]
        %v1334 = vld [vmem:[%s661] sm:$0x1]
        %v1335 = vld [vmem:[%s692] sm:$0x1]
        %v1336 = vld [vmem:[%s700] sm:$0x1]
        %v1338 = vlaneseq
        %v1339 = vshrl.u32 %v1338, 7
        %v1340 = vsub.s32 0, %v1339
        %v1341 = vrot.slane %v1336, %v1340
        %v1343 = vmul.f32 %v1341, %v753
        %v1345 = vlaneseq
        %v1346 = vshrl.u32 %v1345, 7
        %v1347 = vsub.s32 0, %v1346
        %v1348 = vrot.slane %v1335, %v1347
        %v1350 = vadd.f32 %v1348, %v1343
        %v1352 = vlaneseq
        %v1353 = vshrl.u32 %v1352, 7
        %v1354 = vsub.s32 0, %v1353
        %v1355 = vrot.slane %v1334, %v1354
        %v1357 = vmul.f32 %v1355, %v1350
        %v1359 = vlaneseq
        %v1360 = vshrl.u32 %v1359, 7
        %v1361 = vsub.s32 0, %v1360
        %v1362 = vrot.slane %v1333, %v1361
        %v1364 = vadd.f32 %v1362, %v1357
        %v1365 = vadd.f32 %v1330, %v1364
        %v1366 = vmax.f32 %v1365, 0.0
        %vm1367 = vcmask 261120
        %1368 = vst.msk [vmem:[%s639] sm:$0xff] %vm1367, %v1366
        %s1369 = sand.u32 %s382, 1
        %s1370 = scalar_lea.sflag [#allocation5], %s1369
        %s1371 = sand.u32 %s382, 1
        %s1372 = smul.addr %s1371, 8
        %s1373 = scalar_lea.vmem [#allocation4], %s1372
        // Predicated region
        $region69: #{tpu_custom_call.1} parent=67 // pred_check
          %p1374 = pneg %p392
        $region70: #{tpu_custom_call.1} parent=67 // pred_check_branch
          %1376 = sbr.rel (%p1374) target = $region72
        $region71: #{tpu_custom_call.1} parent=67 // pred_region
          %s1378 = ssub.s32 128, 128
          %1379 = vsyncadd %s1370, %s1378
          %s1380 = sadd.s32 %s37, %s38
          %s1381 = smul.addr %s1380, 128
          %s1382 = scalar_lea.hbm %s13, %s1381
          %s1384 = sshll.u32 %s1373, 4
          %s1385 = int_to_ptr.vmem [resolvable:$true] %s1384
          %1387 = dma.vmem_to_hbm [thread:$0]  %s1385, 128, %s1382, %s1370
        $region72: #{tpu_custom_call.1} parent=67 // pred_fallthru
          _
      $region68: #{tpu_custom_call.1} parent=5 // pred_fallthru
        _
      %p1388 = scmp.le.s32.totalorder 2, %s28
      // Predicated region
      $region73: #{tpu_custom_call.1} parent=5 // pred_check
        %p1389 = pneg %p1388
      $region74: #{tpu_custom_call.1} parent=5 // pred_check_branch
        %1391 = sbr.rel (%p1389) target = $region76
      $region75: #{tpu_custom_call.1} parent=5 // pred_region
        %s1392 = ssub.s32 %s28, 2
        // Predicated region
        $region77: #{tpu_custom_call.1} parent=75 // pred_check
          %p1393 = pneg %p398
        $region78: #{tpu_custom_call.1} parent=75 // pred_check_branch
          %1395 = sbr.rel (%p1393) target = $region80
        $region79: #{tpu_custom_call.1} parent=75 // pred_region
          %s1396 = sand.u32 %s383, 1
          %s1397 = scalar_lea.sflag [#allocation5], %s1396
          %s1398 = sand.u32 %s383, 1
          %s1399 = smul.addr %s1398, 8
          %s1400 = scalar_lea.vmem [#allocation4], %s1399
          %1401 = dma.done %s1397, 128
        $region80: #{tpu_custom_call.1} parent=75 // pred_fallthru
          _
      $region76: #{tpu_custom_call.1} parent=5 // pred_fallthru
        _
    $region6: #{tpu_custom_call.1} parent=1 // loop_footer
      %s32 = sadd.s32 1, %s28
    $region7: #{tpu_custom_call.1} parent=1 // loop_footer_branch
      %27 = sbr.rel target = $region3
    $region8: #{tpu_custom_call.1} parent=1 // loop_exit
      _
    %1402 = vsyncpa [#allocation5], 1
    %s1403 = scalar_lea.sflag [#allocation5], 1
    %1404 = vsyncpa %s1403, 1

</llo_original>
